<compile_context>
chip_gen: v7x
topology: tpu7x:2x2x1
jax: 0.10.0
libtpu: 0.0.40
codegen_flags: <defaults>
</compile_context>

<pallas_src>
import functools

import jax
import jax.numpy as jnp
from jax import lax
from jax.experimental import pallas as pl
from jax.experimental.pallas import tpu as pltpu


# ---------------------------------------------------------------------------
# Pallas kernel
# ---------------------------------------------------------------------------
def _conv_attention_kernel(w_ref, q_ref, k_ref, v_ref, o_ref, *,
                           kq, kk, causal, seq_len, head_block):
    S = seq_len
    pad_k = (kk - 1) // 2
    taps = kq * kk
    h_base = pl.program_id(1) * head_block

    # Tiny broadcastable index vectors.
    q_idx = lax.broadcasted_iota(jnp.int32, (S, 1), 0)   # (S, 1) query index
    c_idx = lax.broadcasted_iota(jnp.int32, (1, S), 1)   # (1, S) key index

    # ---- loop-invariant masks, hoisted out of the head / tap loops --------
    causal_mask = (c_idx > q_idx) if causal else None     # (S, S) bool
    row_valid = {}                                         # per row-tap, (S,1)
    for i in range(kq - 1):
        dq = i - (kq - 1)                                  # dq < 0
        row_valid[i] = q_idx >= -dq
    col_valid = {}                                         # per col-tap, (1,S)
    for j in range(kk):
        dk = j - pad_k
        if dk > 0:
            col_valid[j] = c_idx < S - dk
        elif dk < 0:
            col_valid[j] = c_idx >= -dk

    def head_body(hh, carry):
        q = q_ref[0, hh].astype(jnp.float32)               # (S, D)
        k = k_ref[0, hh].astype(jnp.float32)               # (S, D)
        v = v_ref[0, hh].astype(jnp.float32)               # (S, D)
        w_base = (h_base + hh) * taps                      # SMEM base index

        # scores = Q @ K^T on the MXU without materialising K^T.
        scores = lax.dot_general(q, k, (((1,), (1,)), ((), ())),
                                 preferred_element_type=jnp.float32)  # (S, S)
        if causal:
            scores = jnp.where(causal_mask, 0.0, scores)   # masked_fill(mask, 0)

        # Depthwise conv with F.conv2d semantics:
        #   pad_q = kq-1 zero rows on top (causal along q),
        #   pad_k = (kk-1)//2 zero cols on both sides (same along k).
        # Weights already carry the softmax scale (folded in the wrapper).
        # Center tap (dq = 0, dk = 0) initialises the accumulator directly.
        conv = w_ref[w_base + (kq - 1) * kk + pad_k] * scores

        # Remaining taps of the dq == 0 row (no row roll / row mask needed).
        for j in range(kk):
            dk = j - pad_k
            if dk == 0:
                continue
            term = pltpu.roll(scores, shift=(-dk) % S, axis=1)
            term = jnp.where(col_valid[j], term, 0.0)
            conv = conv + w_ref[w_base + (kq - 1) * kk + j] * term

        # Rows with dq < 0: one axis-0 roll + row mask per i, shared over j.
        for i in range(kq - 1):
            dq = i - (kq - 1)                              # dq < 0
            rolled = pltpu.roll(scores, shift=(-dq) % S, axis=0)
            rolled = jnp.where(row_valid[i], rolled, 0.0)
            for j in range(kk):
                dk = j - pad_k
                if dk == 0:
                    term = rolled
                else:
                    term = pltpu.roll(rolled, shift=(-dk) % S, axis=1)
                    term = jnp.where(col_valid[j], term, 0.0)
                conv = conv + w_ref[w_base + i * kk + j] * term

        if causal:
            conv = jnp.where(causal_mask, -jnp.inf, conv)  # masked_fill(mask, -inf)

        # Softmax with row normalisation deferred until after p @ V.
        m = jnp.max(conv, axis=-1, keepdims=True)                  # (S, 1)
        p = jnp.exp(conv - m)                                      # (S, S)
        denom = jnp.sum(p, axis=-1, keepdims=True)                 # (S, 1)
        out = jnp.dot(p, v, preferred_element_type=jnp.float32)    # (S, D)
        # approx=True would use the EUP vrcp path; kept exact to preserve the
        # 2e-4 validation tolerance (the S*S -> S division win is taken).
        out = out * pl.reciprocal(denom, approx=False)
        o_ref[0, hh] = out.astype(o_ref.dtype)
        return carry

    # fori_loop (not a static unroll) bounds the per-head live ranges of the
    # (S,S) temporaries, avoiding vreg spills across heads.
    lax.fori_loop(0, head_block, head_body, 0)


def _pick_head_block(n_heads, max_hb=8):
    """Largest divisor of n_heads that still leaves >= 2 grid steps along the
    head axis (keeps both v7x TensorCores busy and the pipeline deep)."""
    best = 1
    for hb in range(1, min(n_heads, max_hb) + 1):
        if n_heads % hb != 0:
            continue
        if n_heads // hb >= 2 or n_heads == 1:
            best = hb
    return best


def conv_attention(Q, K, V, conv_weight, *, causal=True, softmax_scale=None):
    B, H, S, D = Q.shape
    Hw, kq, kk = conv_weight.shape
    assert Hw == H
    if softmax_scale is None:
        softmax_scale = 1.0 / (D ** 0.5)

    Hb = _pick_head_block(H)
    kernel = functools.partial(
        _conv_attention_kernel, kq=kq, kk=kk,
        causal=bool(causal), seq_len=S, head_block=Hb)

    # Per-head conv weights with the softmax scale folded in (conv is linear
    # in w, so this removes one full (S,S) multiply per head), flattened to
    # 1-D so the SMEM prefetch buffer isn't padded to (8,128) words.
    w_flat = (conv_weight.astype(jnp.float32)
              * jnp.float32(softmax_scale)).reshape(H * kq * kk)

    qkv_spec = pl.BlockSpec((1, Hb, S, D), lambda b, h, w: (b, h, 0, 0))
    grid_spec = pltpu.PrefetchScalarGridSpec(
        num_scalar_prefetch=1,
        grid=(B, H // Hb),
        in_specs=[qkv_spec, qkv_spec, qkv_spec],
        out_specs=qkv_spec,
    )
    return pl.pallas_call(
        kernel,
        out_shape=jax.ShapeDtypeStruct((B, H, S, D), Q.dtype),
        grid_spec=grid_spec,
        compiler_params=pltpu.CompilerParams(
            dimension_semantics=("parallel", "parallel")),
    )(w_flat, Q, K, V)


# ---------------------------------------------------------------------------
# Pure-JAX reference (mirror of the PyTorch forward) for validation
# ---------------------------------------------------------------------------
def ref_conv_attention(Q, K, V, conv_weight, *, causal=True, softmax_scale=None):
    B, H, S, D = Q.shape
    _, kq, kk = conv_weight.shape
    if softmax_scale is None:
        softmax_scale = 1.0 / (D ** 0.5)
    hp = jax.lax.Precision.HIGHEST
    scores = jnp.einsum("bhqd,bhkd->bhqk", Q, K, precision=hp)
    mask = jnp.triu(jnp.ones((S, S), dtype=bool), k=1)
    if causal:
        scores = jnp.where(mask, 0.0, scores)
    pad_q = kq - 1
    pad_k = (kk - 1) // 2
    padded = jnp.pad(scores, ((0, 0), (0, 0), (pad_q, 0), (pad_k, pad_k)))
    conv = jnp.zeros_like(scores)
    for i in range(kq):
        for j in range(kk):
            conv = conv + (conv_weight[:, i, j][None, :, None, None]
                           * padded[:, :, i:i + S, j:j + S])
    if causal:
        conv = jnp.where(mask, -jnp.inf, conv)
    attn = jax.nn.softmax(conv * softmax_scale, axis=-1)
    return jnp.einsum("bhqk,bhkd->bhqd", attn, V, precision=hp)


# ---------------------------------------------------------------------------
def init_conv_weight(n_heads, kq=3, kk=3):
    """Identity-like init, exactly as the PyTorch module's _init_parameters."""
    w = jnp.zeros((n_heads, kq, kk), jnp.float32)
    return w.at[:, kq - 1, kk // 2].set(1.0)


if __name__ == "__main__":
    B, H, S, D = 2, 4, 128, 32
    KQ = KK = 3

    key = jax.random.PRNGKey(0)
    kq_, kk_, kv_, kw_ = jax.random.split(key, 4)
    Q = jax.random.normal(kq_, (B, H, S, D), jnp.float32)
    K = jax.random.normal(kk_, (B, H, S, D), jnp.float32)
    V = jax.random.normal(kv_, (B, H, S, D), jnp.float32)

    # Module parameters (identity-like kernel, as in __init__).
    w_identity = init_conv_weight(H, KQ, KK)

    out = conv_attention(Q, K, V, w_identity, causal=True)
    jax.block_until_ready(out)
    ref = ref_conv_attention(Q, K, V, w_identity, causal=True)
    assert out.shape == (B, H, S, D)
    assert jnp.allclose(out, ref, atol=2e-4, rtol=2e-4), "identity-weight mismatch"

    # Non-identity kernel so the conv path (all 9 taps) is actually exercised.
    w_rand = 0.1 * jax.random.normal(kw_, (H, KQ, KK), jnp.float32)
    out2 = conv_attention(Q, K, V, w_rand, causal=True)
    jax.block_until_ready(out2)
    ref2 = ref_conv_attention(Q, K, V, w_rand, causal=True)
    assert jnp.allclose(out2, ref2, atol=2e-4, rtol=2e-4), "conv-weight mismatch"

    # Non-causal branch.
    out3 = conv_attention(Q, K, V, w_rand, causal=False)
    jax.block_until_ready(out3)
    ref3 = ref_conv_attention(Q, K, V, w_rand, causal=False)
    assert jnp.allclose(out3, ref3, atol=2e-4, rtol=2e-4), "non-causal mismatch"

    print("KERNEL_OK")
</pallas_src>

<mosaic_0001>
module attributes {stable_mosaic.version = 11 : i64} {
  func.func @_conv_attention_kernel(%arg0: i32, %arg1: i32, %arg2: memref<36xf32, #tpu.memory_space<smem>>, %arg3: memref<1x2x128x32xf32, #tpu.memory_space<vmem>>, %arg4: memref<1x2x128x32xf32, #tpu.memory_space<vmem>>, %arg5: memref<1x2x128x32xf32, #tpu.memory_space<vmem>>, %arg6: memref<1x2x128x32xf32, #tpu.memory_space<vmem>>) attributes {dimension_semantics = [#tpu.dimension_semantics<parallel>, #tpu.dimension_semantics<parallel>], iteration_bounds = array<i64: 2, 2>, scalar_prefetch = 1 : i64, scratch_operands = 0 : i64, tpu.core_type = #tpu.core_type<tc>, window_params = [{transform_indices = @transform_0, window_bounds = array<i64: 1, 2, 128, 32>}, {transform_indices = @transform_1, window_bounds = array<i64: 1, 2, 128, 32>}, {transform_indices = @transform_2, window_bounds = array<i64: 1, 2, 128, 32>}, {transform_indices = @transform_3, window_bounds = array<i64: 1, 2, 128, 32>}]} {
    %c2_i32 = arith.constant 2 : i32
    %0 = arith.muli %arg1, %c2_i32 : i32
    %1 = tpu.iota {dimensions = array<i32: 0>} : vector<128x1xi32>
    %2 = tpu.iota {dimensions = array<i32: 1>} : vector<1x128xi32>
    %3 = vector.broadcast %2 : vector<1x128xi32> to vector<128x128xi32>
    %4 = vector.broadcast %1 : vector<128x1xi32> to vector<128x128xi32>
    %5 = arith.cmpi sgt, %3, %4 : vector<128x128xi32>
    %c2_i32_0 = arith.constant 2 : i32
    %6 = vector.broadcast %c2_i32_0 : i32 to vector<128x1xi32>
    %7 = arith.cmpi sge, %1, %6 : vector<128x1xi32>
    %c1_i32 = arith.constant 1 : i32
    %8 = vector.broadcast %c1_i32 : i32 to vector<128x1xi32>
    %9 = arith.cmpi sge, %1, %8 : vector<128x1xi32>
    %c1_i32_1 = arith.constant 1 : i32
    %10 = vector.broadcast %c1_i32_1 : i32 to vector<1x128xi32>
    %11 = arith.cmpi sge, %2, %10 : vector<1x128xi32>
    %c127_i32 = arith.constant 127 : i32
    %12 = vector.broadcast %c127_i32 : i32 to vector<1x128xi32>
    %13 = arith.cmpi slt, %2, %12 : vector<1x128xi32>
    %c0_i32 = arith.constant 0 : i32
    %c2_i32_2 = arith.constant 2 : i32
    %14 = arith.addi %c0_i32, %c2_i32_2 : i32
    %c1_i32_3 = arith.constant 1 : i32
    scf.for %arg7 = %c0_i32 to %14 step %c1_i32_3  : i32 {
      %c0 = arith.constant 0 : index
      %15 = arith.index_cast %arg7 : i32 to index
      %c0_5 = arith.constant 0 : index
      %c0_6 = arith.constant 0 : index
      %16 = vector.load %arg3[%c0, %15, %c0_5, %c0_6] : memref<1x2x128x32xf32, #tpu.memory_space<vmem>>, vector<1x1x128x32xf32>
      %17 = vector.shape_cast %16 : vector<1x1x128x32xf32> to vector<128x32xf32>
      %c0_7 = arith.constant 0 : index
      %18 = arith.index_cast %arg7 : i32 to index
      %c0_8 = arith.constant 0 : index
      %c0_9 = arith.constant 0 : index
      %19 = vector.load %arg4[%c0_7, %18, %c0_8, %c0_9] : memref<1x2x128x32xf32, #tpu.memory_space<vmem>>, vector<1x1x128x32xf32>
      %20 = vector.shape_cast %19 : vector<1x1x128x32xf32> to vector<128x32xf32>
      %c0_10 = arith.constant 0 : index
      %21 = arith.index_cast %arg7 : i32 to index
      %c0_11 = arith.constant 0 : index
      %c0_12 = arith.constant 0 : index
      %22 = vector.load %arg5[%c0_10, %21, %c0_11, %c0_12] : memref<1x2x128x32xf32, #tpu.memory_space<vmem>>, vector<1x1x128x32xf32>
      %23 = vector.shape_cast %22 : vector<1x1x128x32xf32> to vector<128x32xf32>
      %24 = arith.addi %0, %arg7 : i32
      %c9_i32 = arith.constant 9 : i32
      %25 = arith.muli %24, %c9_i32 : i32
      %cst = arith.constant dense<0.000000e+00> : vector<128x128xf32>
      %26 = tpu.matmul %17, %20, %cst {dimension_numbers = #tpu.dot_dimension_numbers<[1], [1], [0], [0], [0, 0, 1, 0], [], []>} : vector<128x32xf32>, vector<128x32xf32>, vector<128x128xf32> -> vector<128x128xf32>
      %cst_13 = arith.constant 0.000000e+00 : f32
      %27 = vector.broadcast %cst_13 : f32 to vector<128x128xf32>
      %28 = arith.select %5, %27, %26 : vector<128x128xi1>, vector<128x128xf32>
      %c6_i32 = arith.constant 6 : i32
      %29 = arith.addi %25, %c6_i32 : i32
      %c1_i32_14 = arith.constant 1 : i32
      %30 = arith.addi %29, %c1_i32_14 : i32
      %31 = arith.index_cast %30 : i32 to index
      %32 = memref.load %arg2[%31] : memref<36xf32, #tpu.memory_space<smem>>
      %33 = vector.broadcast %32 : f32 to vector<128x128xf32>
      %34 = arith.mulf %33, %28 : vector<128x128xf32>
      %c1_i32_15 = arith.constant 1 : i32
      %35 = tpu.dynamic_rotate %28 by %c1_i32_15 dim 1 : vector<128x128xf32>, i32 -> vector<128x128xf32>
      %cst_16 = arith.constant 0.000000e+00 : f32
      %36 = vector.shape_cast %11 : vector<1x128xi1> to vector<1x128xi1>
      %37 = vector.broadcast %36 : vector<1x128xi1> to vector<128x128xi1>
      %38 = vector.broadcast %cst_16 : f32 to vector<128x128xf32>
      %39 = arith.select %37, %35, %38 : vector<128x128xi1>, vector<128x128xf32>
      %c6_i32_17 = arith.constant 6 : i32
      %40 = arith.addi %25, %c6_i32_17 : i32
      %c0_i32_18 = arith.constant 0 : i32
      %41 = arith.addi %40, %c0_i32_18 : i32
      %42 = arith.index_cast %41 : i32 to index
      %43 = memref.load %arg2[%42] : memref<36xf32, #tpu.memory_space<smem>>
      %44 = vector.broadcast %43 : f32 to vector<128x128xf32>
      %45 = arith.mulf %44, %39 : vector<128x128xf32>
      %46 = arith.addf %34, %45 : vector<128x128xf32>
      %c127_i32_19 = arith.constant 127 : i32
      %47 = tpu.dynamic_rotate %28 by %c127_i32_19 dim 1 : vector<128x128xf32>, i32 -> vector<128x128xf32>
      %cst_20 = arith.constant 0.000000e+00 : f32
      %48 = vector.shape_cast %13 : vector<1x128xi1> to vector<1x128xi1>
      %49 = vector.broadcast %48 : vector<1x128xi1> to vector<128x128xi1>
      %50 = vector.broadcast %cst_20 : f32 to vector<128x128xf32>
      %51 = arith.select %49, %47, %50 : vector<128x128xi1>, vector<128x128xf32>
      %c6_i32_21 = arith.constant 6 : i32
      %52 = arith.addi %25, %c6_i32_21 : i32
      %c2_i32_22 = arith.constant 2 : i32
      %53 = arith.addi %52, %c2_i32_22 : i32
      %54 = arith.index_cast %53 : i32 to index
      %55 = memref.load %arg2[%54] : memref<36xf32, #tpu.memory_space<smem>>
      %56 = vector.broadcast %55 : f32 to vector<128x128xf32>
      %57 = arith.mulf %56, %51 : vector<128x128xf32>
      %58 = arith.addf %46, %57 : vector<128x128xf32>
      %c2_i32_23 = arith.constant 2 : i32
      %59 = tpu.dynamic_rotate %28 by %c2_i32_23 dim 0 : vector<128x128xf32>, i32 -> vector<128x128xf32>
      %cst_24 = arith.constant 0.000000e+00 : f32
      %60 = vector.shape_cast %7 : vector<128x1xi1> to vector<128x1xi1>
      %61 = vector.broadcast %60 : vector<128x1xi1> to vector<128x128xi1>
      %62 = vector.broadcast %cst_24 : f32 to vector<128x128xf32>
      %63 = arith.select %61, %59, %62 : vector<128x128xi1>, vector<128x128xf32>
      %c1_i32_25 = arith.constant 1 : i32
      %64 = tpu.dynamic_rotate %63 by %c1_i32_25 dim 1 : vector<128x128xf32>, i32 -> vector<128x128xf32>
      %cst_26 = arith.constant 0.000000e+00 : f32
      %65 = vector.shape_cast %11 : vector<1x128xi1> to vector<1x128xi1>
      %66 = vector.broadcast %65 : vector<1x128xi1> to vector<128x128xi1>
      %67 = vector.broadcast %cst_26 : f32 to vector<128x128xf32>
      %68 = arith.select %66, %64, %67 : vector<128x128xi1>, vector<128x128xf32>
      %c0_i32_27 = arith.constant 0 : i32
      %69 = arith.addi %25, %c0_i32_27 : i32
      %c0_i32_28 = arith.constant 0 : i32
      %70 = arith.addi %69, %c0_i32_28 : i32
      %71 = arith.index_cast %70 : i32 to index
      %72 = memref.load %arg2[%71] : memref<36xf32, #tpu.memory_space<smem>>
      %73 = vector.broadcast %72 : f32 to vector<128x128xf32>
      %74 = arith.mulf %73, %68 : vector<128x128xf32>
      %75 = arith.addf %58, %74 : vector<128x128xf32>
      %c0_i32_29 = arith.constant 0 : i32
      %76 = arith.addi %25, %c0_i32_29 : i32
      %c1_i32_30 = arith.constant 1 : i32
      %77 = arith.addi %76, %c1_i32_30 : i32
      %78 = arith.index_cast %77 : i32 to index
      %79 = memref.load %arg2[%78] : memref<36xf32, #tpu.memory_space<smem>>
      %80 = vector.broadcast %79 : f32 to vector<128x128xf32>
      %81 = arith.mulf %80, %63 : vector<128x128xf32>
      %82 = arith.addf %75, %81 : vector<128x128xf32>
      %c127_i32_31 = arith.constant 127 : i32
      %83 = tpu.dynamic_rotate %63 by %c127_i32_31 dim 1 : vector<128x128xf32>, i32 -> vector<128x128xf32>
      %cst_32 = arith.constant 0.000000e+00 : f32
      %84 = vector.shape_cast %13 : vector<1x128xi1> to vector<1x128xi1>
      %85 = vector.broadcast %84 : vector<1x128xi1> to vector<128x128xi1>
      %86 = vector.broadcast %cst_32 : f32 to vector<128x128xf32>
      %87 = arith.select %85, %83, %86 : vector<128x128xi1>, vector<128x128xf32>
      %c0_i32_33 = arith.constant 0 : i32
      %88 = arith.addi %25, %c0_i32_33 : i32
      %c2_i32_34 = arith.constant 2 : i32
      %89 = arith.addi %88, %c2_i32_34 : i32
      %90 = arith.index_cast %89 : i32 to index
      %91 = memref.load %arg2[%90] : memref<36xf32, #tpu.memory_space<smem>>
      %92 = vector.broadcast %91 : f32 to vector<128x128xf32>
      %93 = arith.mulf %92, %87 : vector<128x128xf32>
      %94 = arith.addf %82, %93 : vector<128x128xf32>
      %c1_i32_35 = arith.constant 1 : i32
      %95 = tpu.dynamic_rotate %28 by %c1_i32_35 dim 0 : vector<128x128xf32>, i32 -> vector<128x128xf32>
      %cst_36 = arith.constant 0.000000e+00 : f32
      %96 = vector.shape_cast %9 : vector<128x1xi1> to vector<128x1xi1>
      %97 = vector.broadcast %96 : vector<128x1xi1> to vector<128x128xi1>
      %98 = vector.broadcast %cst_36 : f32 to vector<128x128xf32>
      %99 = arith.select %97, %95, %98 : vector<128x128xi1>, vector<128x128xf32>
      %c1_i32_37 = arith.constant 1 : i32
      %100 = tpu.dynamic_rotate %99 by %c1_i32_37 dim 1 : vector<128x128xf32>, i32 -> vector<128x128xf32>
      %cst_38 = arith.constant 0.000000e+00 : f32
      %101 = vector.shape_cast %11 : vector<1x128xi1> to vector<1x128xi1>
      %102 = vector.broadcast %101 : vector<1x128xi1> to vector<128x128xi1>
      %103 = vector.broadcast %cst_38 : f32 to vector<128x128xf32>
      %104 = arith.select %102, %100, %103 : vector<128x128xi1>, vector<128x128xf32>
      %c3_i32 = arith.constant 3 : i32
      %105 = arith.addi %25, %c3_i32 : i32
      %c0_i32_39 = arith.constant 0 : i32
      %106 = arith.addi %105, %c0_i32_39 : i32
      %107 = arith.index_cast %106 : i32 to index
      %108 = memref.load %arg2[%107] : memref<36xf32, #tpu.memory_space<smem>>
      %109 = vector.broadcast %108 : f32 to vector<128x128xf32>
      %110 = arith.mulf %109, %104 : vector<128x128xf32>
      %111 = arith.addf %94, %110 : vector<128x128xf32>
      %c3_i32_40 = arith.constant 3 : i32
      %112 = arith.addi %25, %c3_i32_40 : i32
      %c1_i32_41 = arith.constant 1 : i32
      %113 = arith.addi %112, %c1_i32_41 : i32
      %114 = arith.index_cast %113 : i32 to index
      %115 = memref.load %arg2[%114] : memref<36xf32, #tpu.memory_space<smem>>
      %116 = vector.broadcast %115 : f32 to vector<128x128xf32>
      %117 = arith.mulf %116, %99 : vector<128x128xf32>
      %118 = arith.addf %111, %117 : vector<128x128xf32>
      %c127_i32_42 = arith.constant 127 : i32
      %119 = tpu.dynamic_rotate %99 by %c127_i32_42 dim 1 : vector<128x128xf32>, i32 -> vector<128x128xf32>
      %cst_43 = arith.constant 0.000000e+00 : f32
      %120 = vector.shape_cast %13 : vector<1x128xi1> to vector<1x128xi1>
      %121 = vector.broadcast %120 : vector<1x128xi1> to vector<128x128xi1>
      %122 = vector.broadcast %cst_43 : f32 to vector<128x128xf32>
      %123 = arith.select %121, %119, %122 : vector<128x128xi1>, vector<128x128xf32>
      %c3_i32_44 = arith.constant 3 : i32
      %124 = arith.addi %25, %c3_i32_44 : i32
      %c2_i32_45 = arith.constant 2 : i32
      %125 = arith.addi %124, %c2_i32_45 : i32
      %126 = arith.index_cast %125 : i32 to index
      %127 = memref.load %arg2[%126] : memref<36xf32, #tpu.memory_space<smem>>
      %128 = vector.broadcast %127 : f32 to vector<128x128xf32>
      %129 = arith.mulf %128, %123 : vector<128x128xf32>
      %130 = arith.addf %118, %129 : vector<128x128xf32>
      %cst_46 = arith.constant 0xFF800000 : f32
      %131 = vector.broadcast %cst_46 : f32 to vector<128x128xf32>
      %132 = arith.select %5, %131, %130 : vector<128x128xi1>, vector<128x128xf32>
      %cst_47 = arith.constant dense<0xFF800000> : vector<128xf32>
      %133 = vector.multi_reduction <maximumf>, %132, %cst_47 [1] : vector<128x128xf32> to vector<128xf32>
      %134 = vector.shape_cast %133 : vector<128xf32> to vector<128x1xf32>
      %135 = vector.broadcast %134 : vector<128x1xf32> to vector<128x128xf32>
      %136 = arith.subf %132, %135 : vector<128x128xf32>
      %137 = math.exp %136 : vector<128x128xf32>
      %cst_48 = arith.constant dense<0.000000e+00> : vector<128xf32>
      %138 = vector.multi_reduction <add>, %137, %cst_48 [1] : vector<128x128xf32> to vector<128xf32>
      %139 = vector.shape_cast %138 : vector<128xf32> to vector<128x1xf32>
      %cst_49 = arith.constant dense<0.000000e+00> : vector<128x32xf32>
      %140 = tpu.matmul %137, %23, %cst_49 {dimension_numbers = #tpu.dot_dimension_numbers<[1], [0], [0], [1], [0, 0, 1, 1], [], []>} : vector<128x128xf32>, vector<128x32xf32>, vector<128x32xf32> -> vector<128x32xf32>
      %141 = tpu.reciprocal %139 : vector<128x1xf32> -> vector<128x1xf32>
      %142 = vector.broadcast %141 : vector<128x1xf32> to vector<128x32xf32>
      %143 = arith.mulf %140, %142 : vector<128x32xf32>
      %c0_50 = arith.constant 0 : index
      %144 = arith.index_cast %arg7 : i32 to index
      %c0_51 = arith.constant 0 : index
      %c0_52 = arith.constant 0 : index
      %145 = vector.load %arg6[%c0_50, %144, %c0_51, %c0_52] : memref<1x2x128x32xf32, #tpu.memory_space<vmem>>, vector<1x1x128x32xf32>
      %146 = vector.shape_cast %145 : vector<1x1x128x32xf32> to vector<128x32xf32>
      %147 = vector.shape_cast %143 : vector<128x32xf32> to vector<1x1x128x32xf32>
      tpu.vector_store %arg6[%c0_50, %144, %c0_51, %c0_52], %147 {strides = array<i32>} : memref<1x2x128x32xf32, #tpu.memory_space<vmem>>, vector<1x1x128x32xf32>,
    }
    %c2_i32_4 = arith.constant 2 : i32
    return
  }
  func.func @transform_0(%arg0: i32, %arg1: i32, %arg2: memref<36xf32, #tpu.memory_space<smem>>) -> (i32, i32, i32, i32) {
    %c0_i32 = arith.constant 0 : i32
    %c0_i32_0 = arith.constant 0 : i32
    %c0_i32_1 = arith.constant 0 : i32
    return %arg0, %arg1, %c0_i32, %c0_i32_0 : i32, i32, i32, i32
  }
  func.func @transform_1(%arg0: i32, %arg1: i32, %arg2: memref<36xf32, #tpu.memory_space<smem>>) -> (i32, i32, i32, i32) {
    %c0_i32 = arith.constant 0 : i32
    %c0_i32_0 = arith.constant 0 : i32
    %c0_i32_1 = arith.constant 0 : i32
    return %arg0, %arg1, %c0_i32, %c0_i32_0 : i32, i32, i32, i32
  }
  func.func @transform_2(%arg0: i32, %arg1: i32, %arg2: memref<36xf32, #tpu.memory_space<smem>>) -> (i32, i32, i32, i32) {
    %c0_i32 = arith.constant 0 : i32
    %c0_i32_0 = arith.constant 0 : i32
    %c0_i32_1 = arith.constant 0 : i32
    return %arg0, %arg1, %c0_i32, %c0_i32_0 : i32, i32, i32, i32
  }
  func.func @transform_3(%arg0: i32, %arg1: i32, %arg2: memref<36xf32, #tpu.memory_space<smem>>) -> (i32, i32, i32, i32) {
    %c0_i32 = arith.constant 0 : i32
    %c0_i32_0 = arith.constant 0 : i32
    %c0_i32_1 = arith.constant 0 : i32
    return %arg0, %arg1, %c0_i32, %c0_i32_0 : i32, i32, i32, i32
  }
}

</mosaic_0001>

<llo_original>
// kernel: tpu_custom_call.1
$region0: #{tpu_custom_call.1}
  #allocation0 [shape = 'u32[]', space=smem, size = 0x4, offset = 0x4, fixed_abs, tag = 'smem constant byte address 0x4 - core index']
  #allocation1 [shape = 'u32[144,128]{1,0:T(1,128)}', space=vmem, size = 0x12000, scoped, tag = 'internal scratch']
  #allocation2 [shape = 's32[1]{0}', space=sflag, size = 0x4, scoped, tag = 'scoped memory for tpu_custom_call.1']
  #allocation3 [shape = 'u8[512]{0}', space=smem, size = 0x200, scoped, tag = 'prefetched SMEM operand 0']
  %s0 = inlined_call_operand.vmem [shape: f32[36], index: 0, kind: input, shape index: {}]
  %s1 = inlined_call_operand.vmem [shape: f32[2,4,128,32], index: 1, kind: input, shape index: {}]
  %s2 = inlined_call_operand.vmem [shape: f32[2,4,128,32], index: 2, kind: input, shape index: {}]
  %s3 = inlined_call_operand.vmem [shape: f32[2,4,128,32], index: 3, kind: input, shape index: {}]
  %s4 = inlined_call_operand.vmem [shape: f32[2,4,128,32], index: 4, kind: output, shape index: {}]
  %s5 = sld [smem:[#allocation0]]
  $region52: #{tpu_custom_call.1} parent=0
    _
  %s7 = ssub.s32 1, %s5
  %s8 = scalar_select 0, %s7, %s5
  %s9 = sshll.u32 %s0, 4
  %s10 = int_to_ptr.vmem [resolvable:$true] %s9
  %12 = dma.vmem_to_smem %s10, 16, [#allocation3], [#allocation2]
  %13 = dma.done [#allocation2], 16
  %14 = sfence
  loop: start=0, step=1, limit=6
  $region2: #{tpu_custom_call.1} parent=0 // loop_pre_header
    _
  $region3: #{tpu_custom_call.1} parent=0 // loop_header
    %s16 = sphi 0, %s20
    %p17 = scmp.ge.s32.totalorder %s16, 6
    %s23 = sphi 0, %s35
    %s24 = sphi 0, %s31
    %s25 = sphi 0, %s23
    %s26 = sphi 0, %s24
    %s27 = sphi 0, %s25
    %s28 = sphi 0, %s26
    %s40 = sphi 0, %s42
    %s43 = sphi 0, %s40
    %s44 = sphi 0, %s43
    %s60 = sphi 0, %s44
    %s68 = sphi 0, %s70
    %s71 = sphi 0, %s68
    %s72 = sphi 0, %s71
    %s88 = sphi 0, %s72
    %s96 = sphi 0, %s98
    %s99 = sphi 0, %s96
    %s100 = sphi 0, %s99
    %s116 = sphi 0, %s100
    %s124 = sphi 0, %s126
    %s127 = sphi 0, %s124
    %s128 = sphi 0, %s127
    %s144 = sphi 0, %s128
  $region4: #{tpu_custom_call.1} parent=0 // loop_header_branch
    %19 = sbr.rel (%p17) target = $region8
  $region5: #{tpu_custom_call.1} parent=0 // loop_body
    %s21 = ssub.s32 %s16, 1
    %s22 = ssub.s32 %s16, 2
    %s29 = sadd.s32 1, %s24
    %p30 = scmp.ge.s32.totalorder %s29, 2
    %s31 = scalar_select %p30, 0, %s29
    %s32 = sadd.s32 1, %s23
    %s33 = scalar_select %p30, %s32, %s23
    %p34 = scmp.ge.s32.totalorder %s33, 2
    %s35 = scalar_select %p34, 0, %s33
    %s36 = ssub.s32 %s23, %s35
    %s37 = ssub.s32 %s24, %s31
    %s38 = sor.u32 %s36, %s37
    %p39 = scmp.eq.s32.totalorder %s38, 0
    %s41 = sadd.s32 %s40, 1
    %s42 = scalar_select %p39, %s40, %s41
    %p45 = pneg %p39
    %p46 = scmp.eq.s32.totalorder %s16, 3
    %p47 = por %p45, %p46
    %p48 = scmp.ne.s32.totalorder %s40, %s43
    %p49 = scmp.eq.s32.totalorder %s16, 0
    %p50 = por %p48, %p49
    %p51 = scmp.ne.s32.totalorder %s40, %s43
    %p52 = scmp.eq.s32.totalorder %s21, 3
    %p53 = por %p51, %p52
    %p54 = scmp.ne.s32.totalorder %s43, %s44
    %p55 = scmp.eq.s32.totalorder %s21, 0
    %p56 = por %p54, %p55
    %p57 = scmp.ne.s32.totalorder %s43, %s44
    %p58 = scmp.eq.s32.totalorder %s22, 3
    %p59 = por %p57, %p58
    %p61 = scmp.ne.s32.totalorder %s44, %s60
    %p62 = scmp.eq.s32.totalorder %s22, 0
    %p63 = por %p61, %p62
    %s64 = ssub.s32 %s23, %s35
    %s65 = ssub.s32 %s24, %s31
    %s66 = sor.u32 %s64, %s65
    %p67 = scmp.eq.s32.totalorder %s66, 0
    %s69 = sadd.s32 %s68, 1
    %s70 = scalar_select %p67, %s68, %s69
    %p73 = pneg %p67
    %p74 = scmp.eq.s32.totalorder %s16, 3
    %p75 = por %p73, %p74
    %p76 = scmp.ne.s32.totalorder %s68, %s71
    %p77 = scmp.eq.s32.totalorder %s16, 0
    %p78 = por %p76, %p77
    %p79 = scmp.ne.s32.totalorder %s68, %s71
    %p80 = scmp.eq.s32.totalorder %s21, 3
    %p81 = por %p79, %p80
    %p82 = scmp.ne.s32.totalorder %s71, %s72
    %p83 = scmp.eq.s32.totalorder %s21, 0
    %p84 = por %p82, %p83
    %p85 = scmp.ne.s32.totalorder %s71, %s72
    %p86 = scmp.eq.s32.totalorder %s22, 3
    %p87 = por %p85, %p86
    %p89 = scmp.ne.s32.totalorder %s72, %s88
    %p90 = scmp.eq.s32.totalorder %s22, 0
    %p91 = por %p89, %p90
    %s92 = ssub.s32 %s23, %s35
    %s93 = ssub.s32 %s24, %s31
    %s94 = sor.u32 %s92, %s93
    %p95 = scmp.eq.s32.totalorder %s94, 0
    %s97 = sadd.s32 %s96, 1
    %s98 = scalar_select %p95, %s96, %s97
    %p101 = pneg %p95
    %p102 = scmp.eq.s32.totalorder %s16, 3
    %p103 = por %p101, %p102
    %p104 = scmp.ne.s32.totalorder %s96, %s99
    %p105 = scmp.eq.s32.totalorder %s16, 0
    %p106 = por %p104, %p105
    %p107 = scmp.ne.s32.totalorder %s96, %s99
    %p108 = scmp.eq.s32.totalorder %s21, 3
    %p109 = por %p107, %p108
    %p110 = scmp.ne.s32.totalorder %s99, %s100
    %p111 = scmp.eq.s32.totalorder %s21, 0
    %p112 = por %p110, %p111
    %p113 = scmp.ne.s32.totalorder %s99, %s100
    %p114 = scmp.eq.s32.totalorder %s22, 3
    %p115 = por %p113, %p114
    %p117 = scmp.ne.s32.totalorder %s100, %s116
    %p118 = scmp.eq.s32.totalorder %s22, 0
    %p119 = por %p117, %p118
    %s120 = ssub.s32 %s23, %s35
    %s121 = ssub.s32 %s24, %s31
    %s122 = sor.u32 %s120, %s121
    %p123 = scmp.eq.s32.totalorder %s122, 0
    %s125 = sadd.s32 %s124, 1
    %s126 = scalar_select %p123, %s124, %s125
    %p129 = pneg %p123
    %p130 = scmp.eq.s32.totalorder %s16, 3
    %p131 = por %p129, %p130
    %p132 = scmp.ne.s32.totalorder %s124, %s127
    %p133 = scmp.eq.s32.totalorder %s16, 0
    %p134 = por %p132, %p133
    %p135 = scmp.ne.s32.totalorder %s124, %s127
    %p136 = scmp.eq.s32.totalorder %s21, 3
    %p137 = por %p135, %p136
    %p138 = scmp.ne.s32.totalorder %s127, %s128
    %p139 = scmp.eq.s32.totalorder %s21, 0
    %p140 = por %p138, %p139
    %p141 = scmp.ne.s32.totalorder %s127, %s128
    %p142 = scmp.eq.s32.totalorder %s22, 3
    %p143 = por %p141, %p142
    %p145 = scmp.ne.s32.totalorder %s128, %s144
    %p146 = scmp.eq.s32.totalorder %s22, 0
    %p147 = por %p145, %p146
    %p148 = scmp.le.s32.totalorder 1, %s16
    %p149 = scmp.lt.s32.totalorder %s16, 5
    %p150 = pnand %p148, %p149
    %p151 = pneg %p150
    // Predicated region
    $region9: #{tpu_custom_call.1} parent=5 // pred_check
      _
    $region10: #{tpu_custom_call.1} parent=5 // pred_check_branch
      %153 = sbr.rel (%p150) target = $region12
    $region11: #{tpu_custom_call.1} parent=5 // pred_region
      %s154 = ssub.s32 %s16, 1
    $region12: #{tpu_custom_call.1} parent=5 // pred_fallthru
      _
    %p155 = scmp.lt.s32.totalorder %s16, 4
    // Predicated region
    $region13: #{tpu_custom_call.1} parent=5 // pred_check
      %p156 = pneg %p155
    $region14: #{tpu_custom_call.1} parent=5 // pred_check_branch
      %158 = sbr.rel (%p156) target = $region16
    $region15: #{tpu_custom_call.1} parent=5 // pred_region
      // Predicated region
      $region17: #{tpu_custom_call.1} parent=15 // pred_check
        %p159 = pneg %p50
      $region18: #{tpu_custom_call.1} parent=15 // pred_check_branch
        %161 = sbr.rel (%p159) target = $region20
      $region19: #{tpu_custom_call.1} parent=15 // pred_region
        %s162 = smul.u32 2, %s24
        %p163 = scmp.lt.s32.totalorder %s23, 1
        %s164 = scalar_select %p163, %s23, 1
        %p165 = scmp.lt.s32.totalorder %s162, 3
        %s166 = scalar_select %p165, %s162, 3
        %s167 = smul.addr %s166, 16
        %s168 = smul.addr %s164, 64
        %s169 = sadd.s32 %s167, %s168
        %s170 = smul.addr %s169, 8
        %s171 = scalar_lea.vmem %s1, %s170
        %s172 = smul.u32 2, %s24
      $region20: #{tpu_custom_call.1} parent=15 // pred_fallthru
        _
      // Predicated region
      $region21: #{tpu_custom_call.1} parent=15 // pred_check
        %p173 = pneg %p78
      $region22: #{tpu_custom_call.1} parent=15 // pred_check_branch
        %175 = sbr.rel (%p173) target = $region24
      $region23: #{tpu_custom_call.1} parent=15 // pred_region
        %s176 = smul.u32 2, %s24
        %p177 = scmp.lt.s32.totalorder %s23, 1
        %s178 = scalar_select %p177, %s23, 1
        %p179 = scmp.lt.s32.totalorder %s176, 3
        %s180 = scalar_select %p179, %s176, 3
        %s181 = smul.addr %s180, 16
        %s182 = smul.addr %s178, 64
        %s183 = sadd.s32 %s181, %s182
        %s184 = smul.addr %s183, 8
        %s185 = scalar_lea.vmem %s2, %s184
        %s186 = smul.u32 2, %s24
      $region24: #{tpu_custom_call.1} parent=15 // pred_fallthru
        _
      // Predicated region
      $region25: #{tpu_custom_call.1} parent=15 // pred_check
        %p187 = pneg %p106
      $region26: #{tpu_custom_call.1} parent=15 // pred_check_branch
        %189 = sbr.rel (%p187) target = $region28
      $region27: #{tpu_custom_call.1} parent=15 // pred_region
        %s190 = smul.u32 2, %s24
        %p191 = scmp.lt.s32.totalorder %s23, 1
        %s192 = scalar_select %p191, %s23, 1
        %p193 = scmp.lt.s32.totalorder %s190, 3
        %s194 = scalar_select %p193, %s190, 3
        %s195 = smul.addr %s194, 16
        %s196 = smul.addr %s192, 64
        %s197 = sadd.s32 %s195, %s196
        %s198 = smul.addr %s197, 8
        %s199 = scalar_lea.vmem %s3, %s198
        %s200 = smul.u32 2, %s24
      $region28: #{tpu_custom_call.1} parent=15 // pred_fallthru
        _
    $region16: #{tpu_custom_call.1} parent=5 // pred_fallthru
      _
    %p201 = scmp.le.s32.totalorder 1, %s16
    %p202 = scmp.lt.s32.totalorder %s16, 5
    %p203 = pnand %p201, %p202
    %p204 = pneg %p203
    // Predicated region
    $region29: #{tpu_custom_call.1} parent=5 // pred_check
      _
    $region30: #{tpu_custom_call.1} parent=5 // pred_check_branch
      %206 = sbr.rel (%p203) target = $region32
    $region31: #{tpu_custom_call.1} parent=5 // pred_region
      %s207 = ssub.s32 %s16, 1
      %s208 = smul.u32 2, %s26
      %p209 = scmp.lt.s32.totalorder %s25, 1
      %s210 = scalar_select %p209, %s25, 1
      %p211 = scmp.lt.s32.totalorder %s208, 3
      %s212 = scalar_select %p211, %s208, 3
      %s213 = smul.addr %s212, 16
      %s214 = smul.addr %s210, 64
      %s215 = sadd.s32 %s213, %s214
      %s216 = smul.addr %s215, 8
      %s217 = scalar_lea.vmem %s1, %s216
      %p218 = pneg %p56
      %p219 = pneg %p53
      %s220 = smul.u32 2, %s26
      %p221 = scmp.lt.s32.totalorder %s25, 1
      %s222 = scalar_select %p221, %s25, 1
      %p223 = scmp.lt.s32.totalorder %s220, 3
      %s224 = scalar_select %p223, %s220, 3
      %s225 = smul.addr %s224, 16
      %s226 = smul.addr %s222, 64
      %s227 = sadd.s32 %s225, %s226
      %s228 = smul.addr %s227, 8
      %s229 = scalar_lea.vmem %s2, %s228
      %p230 = pneg %p84
      %p231 = pneg %p81
      %s232 = smul.u32 2, %s26
      %p233 = scmp.lt.s32.totalorder %s25, 1
      %s234 = scalar_select %p233, %s25, 1
      %p235 = scmp.lt.s32.totalorder %s232, 3
      %s236 = scalar_select %p235, %s232, 3
      %s237 = smul.addr %s236, 16
      %s238 = smul.addr %s234, 64
      %s239 = sadd.s32 %s237, %s238
      %s240 = smul.addr %s239, 8
      %s241 = scalar_lea.vmem %s3, %s240
      %p242 = pneg %p112
      %p243 = pneg %p109
      %p244 = pneg %p140
      %p245 = pneg %p137
      %s246 = smul.u32 2, %s26
      %p247 = scmp.lt.s32.totalorder %s25, 1
      %s248 = scalar_select %p247, %s25, 1
      %p249 = scmp.lt.s32.totalorder %s246, 3
      %s250 = scalar_select %p249, %s246, 3
      %s251 = smul.addr %s250, 16
      %s252 = smul.addr %s248, 64
      %s253 = sadd.s32 %s251, %s252
      %s254 = smul.addr %s253, 8
      %s255 = scalar_lea.vmem %s4, %s254
      %s256 = smul.u32 2, %s26
      %p257 = scmp.lt.s32.totalorder %s25, 1
      %s258 = scalar_select %p257, %s25, 1
      %p259 = scmp.lt.s32.totalorder %s256, 3
      %s260 = scalar_select %p259, %s256, 3
      %s261 = smul.addr %s260, 16
      %s262 = smul.addr %s258, 64
      %s263 = sadd.s32 %s261, %s262
      %s264 = smul.addr %s263, 8
      %s265 = scalar_lea.vmem %s1, %s264
      %s266 = smul.u32 2, %s26
      %s267 = smul.u32 2, %s26
      %p268 = scmp.lt.s32.totalorder %s25, 1
      %s269 = scalar_select %p268, %s25, 1
      %p270 = scmp.lt.s32.totalorder %s267, 3
      %s271 = scalar_select %p270, %s267, 3
      %s272 = smul.addr %s271, 16
      %s273 = smul.addr %s269, 64
      %s274 = sadd.s32 %s272, %s273
      %s275 = smul.addr %s274, 8
      %s276 = scalar_lea.vmem %s2, %s275
      %s277 = smul.u32 2, %s26
      %s278 = smul.u32 2, %s26
      %p279 = scmp.lt.s32.totalorder %s25, 1
      %s280 = scalar_select %p279, %s25, 1
      %p281 = scmp.lt.s32.totalorder %s278, 3
      %s282 = scalar_select %p281, %s278, 3
      %s283 = smul.addr %s282, 16
      %s284 = smul.addr %s280, 64
      %s285 = sadd.s32 %s283, %s284
      %s286 = smul.addr %s285, 8
      %s287 = scalar_lea.vmem %s3, %s286
      %s288 = smul.u32 2, %s26
      %s289 = smul.u32 2, %s26
      %p290 = scmp.lt.s32.totalorder %s25, 1
      %s291 = scalar_select %p290, %s25, 1
      %p292 = scmp.lt.s32.totalorder %s289, 3
      %s293 = scalar_select %p292, %s289, 3
      %s294 = smul.addr %s293, 16
      %s295 = smul.addr %s291, 64
      %s296 = sadd.s32 %s294, %s295
      %s297 = smul.addr %s296, 8
      %s298 = scalar_lea.vmem %s4, %s297
      %s299 = smul.u32 2, %s26
      %s300 = smul.u32 %s26, 2
      %v301 = vlaneseq
      %v302 = vshrl.u32 %v301, 7
      %v303 = vadd.s32 %v302, 8
      %v304 = vadd.s32 %v302, 16
      %v305 = vadd.s32 %v302, 24
      %v306 = vadd.s32 %v302, 32
      %v307 = vadd.s32 %v302, 40
      %v308 = vadd.s32 %v302, 48
      %v309 = vadd.s32 %v302, 56
      %v310 = vadd.s32 %v302, 64
      %v311 = vadd.s32 %v302, 72
      %v312 = vadd.s32 %v302, 80
      %v313 = vadd.s32 %v302, 88
      %v314 = vadd.s32 %v302, 96
      %v315 = vadd.s32 %v302, 104
      %v316 = vadd.s32 %v302, 112
      %v317 = vadd.s32 %v302, 120
      %v318 = vlaneseq
      %v319 = vand.u32 %v318, 127
      %vm320 = vcmp.gt.s32.totalorder %v319, %v302
      %vm321 = vcmp.gt.s32.totalorder %v319, %v303
      %vm322 = vcmp.gt.s32.totalorder %v319, %v304
      %vm323 = vcmp.gt.s32.totalorder %v319, %v305
      %vm324 = vcmp.gt.s32.totalorder %v319, %v306
      %vm325 = vcmp.gt.s32.totalorder %v319, %v307
      %vm326 = vcmp.gt.s32.totalorder %v319, %v308
      %vm327 = vcmp.gt.s32.totalorder %v319, %v309
      %vm328 = vcmp.gt.s32.totalorder %v319, %v310
      %vm329 = vcmp.gt.s32.totalorder %v319, %v311
      %vm330 = vcmp.gt.s32.totalorder %v319, %v312
      %vm331 = vcmp.gt.s32.totalorder %v319, %v313
      %vm332 = vcmp.gt.s32.totalorder %v319, %v314
      %vm333 = vcmp.gt.s32.totalorder %v319, %v315
      %vm334 = vcmp.gt.s32.totalorder %v319, %v316
      %vm335 = vcmp.gt.s32.totalorder %v319, %v317
      %vm336 = vcmp.ge.s32.totalorder %v302, 2
      %vm337 = vcmp.ge.s32.totalorder %v303, 2
      %vm338 = vcmp.ge.s32.totalorder %v304, 2
      %vm339 = vcmp.ge.s32.totalorder %v305, 2
      %vm340 = vcmp.ge.s32.totalorder %v306, 2
      %vm341 = vcmp.ge.s32.totalorder %v307, 2
      %vm342 = vcmp.ge.s32.totalorder %v308, 2
      %vm343 = vcmp.ge.s32.totalorder %v309, 2
      %vm344 = vcmp.ge.s32.totalorder %v310, 2
      %vm345 = vcmp.ge.s32.totalorder %v311, 2
      %vm346 = vcmp.ge.s32.totalorder %v312, 2
      %vm347 = vcmp.ge.s32.totalorder %v313, 2
      %vm348 = vcmp.ge.s32.totalorder %v314, 2
      %vm349 = vcmp.ge.s32.totalorder %v315, 2
      %vm350 = vcmp.ge.s32.totalorder %v316, 2
      %vm351 = vcmp.ge.s32.totalorder %v317, 2
      %vm352 = vcmp.ge.s32.totalorder %v302, 1
      %vm353 = vcmp.ge.s32.totalorder %v303, 1
      %vm354 = vcmp.ge.s32.totalorder %v304, 1
      %vm355 = vcmp.ge.s32.totalorder %v305, 1
      %vm356 = vcmp.ge.s32.totalorder %v306, 1
      %vm357 = vcmp.ge.s32.totalorder %v307, 1
      %vm358 = vcmp.ge.s32.totalorder %v308, 1
      %vm359 = vcmp.ge.s32.totalorder %v309, 1
      %vm360 = vcmp.ge.s32.totalorder %v310, 1
      %vm361 = vcmp.ge.s32.totalorder %v311, 1
      %vm362 = vcmp.ge.s32.totalorder %v312, 1
      %vm363 = vcmp.ge.s32.totalorder %v313, 1
      %vm364 = vcmp.ge.s32.totalorder %v314, 1
      %vm365 = vcmp.ge.s32.totalorder %v315, 1
      %vm366 = vcmp.ge.s32.totalorder %v316, 1
      %vm367 = vcmp.ge.s32.totalorder %v317, 1
      %vm368 = vcmp.ge.s32.totalorder %v319, 1
      %vm369 = vcmp.lt.s32.totalorder %v319, 127
      loop: start=0, step=1, limit=2
      $region33: #{tpu_custom_call.1} parent=31 // loop_pre_header
        _
      $region34: #{tpu_custom_call.1} parent=31 // loop_header
        %s371 = sphi 0, %s375
        %p372 = scmp.ge.s32.totalorder %s371, 2
      $region35: #{tpu_custom_call.1} parent=31 // loop_header_branch
        %374 = sbr.rel (%p372) target = $region39
      $region36: #{tpu_custom_call.1} parent=31 // loop_body
        %s376 = smul.u32 %s371, 128
        %s377 = scalar_lea.vmem %s265, %s376
        %v378 = vld [vmem:[%s377] sm:$0xff]
        %v379 = vld [vmem:[%s377 + $0x8] sm:$0xff]
        %v380 = vld [vmem:[%s377 + $0x10] sm:$0xff]
        %v381 = vld [vmem:[%s377 + $0x18] sm:$0xff]
        %v382 = vld [vmem:[%s377 + $0x20] sm:$0xff]
        %v383 = vld [vmem:[%s377 + $0x28] sm:$0xff]
        %v384 = vld [vmem:[%s377 + $0x30] sm:$0xff]
        %v385 = vld [vmem:[%s377 + $0x38] sm:$0xff]
        %v386 = vld [vmem:[%s377 + $0x40] sm:$0xff]
        %v387 = vld [vmem:[%s377 + $0x48] sm:$0xff]
        %v388 = vld [vmem:[%s377 + $0x50] sm:$0xff]
        %v389 = vld [vmem:[%s377 + $0x58] sm:$0xff]
        %v390 = vld [vmem:[%s377 + $0x60] sm:$0xff]
        %v391 = vld [vmem:[%s377 + $0x68] sm:$0xff]
        %v392 = vld [vmem:[%s377 + $0x70] sm:$0xff]
        %v393 = vld [vmem:[%s377 + $0x78] sm:$0xff]
        %s394 = scalar_lea.vmem %s276, %s376
        %v395 = vld [vmem:[%s394] sm:$0xff]
        %v396 = vld [vmem:[%s394 + $0x8] sm:$0xff]
        %v397 = vld [vmem:[%s394 + $0x10] sm:$0xff]
        %v398 = vld [vmem:[%s394 + $0x18] sm:$0xff]
        %v399 = vld [vmem:[%s394 + $0x20] sm:$0xff]
        %v400 = vld [vmem:[%s394 + $0x28] sm:$0xff]
        %v401 = vld [vmem:[%s394 + $0x30] sm:$0xff]
        %v402 = vld [vmem:[%s394 + $0x38] sm:$0xff]
        %v403 = vld [vmem:[%s394 + $0x40] sm:$0xff]
        %v404 = vld [vmem:[%s394 + $0x48] sm:$0xff]
        %v405 = vld [vmem:[%s394 + $0x50] sm:$0xff]
        %v406 = vld [vmem:[%s394 + $0x58] sm:$0xff]
        %v407 = vld [vmem:[%s394 + $0x60] sm:$0xff]
        %v408 = vld [vmem:[%s394 + $0x68] sm:$0xff]
        %v409 = vld [vmem:[%s394 + $0x70] sm:$0xff]
        %v410 = vld [vmem:[%s394 + $0x78] sm:$0xff]
        %s411 = scalar_lea.vmem %s287, %s376
        %v412 = vld [vmem:[%s411] sm:$0xff]
        %v413 = vld [vmem:[%s411 + $0x8] sm:$0xff]
        %v414 = vld [vmem:[%s411 + $0x10] sm:$0xff]
        %v415 = vld [vmem:[%s411 + $0x18] sm:$0xff]
        %v416 = vld [vmem:[%s411 + $0x20] sm:$0xff]
        %v417 = vld [vmem:[%s411 + $0x28] sm:$0xff]
        %v418 = vld [vmem:[%s411 + $0x30] sm:$0xff]
        %v419 = vld [vmem:[%s411 + $0x38] sm:$0xff]
        %v420 = vld [vmem:[%s411 + $0x40] sm:$0xff]
        %v421 = vld [vmem:[%s411 + $0x48] sm:$0xff]
        %v422 = vld [vmem:[%s411 + $0x50] sm:$0xff]
        %v423 = vld [vmem:[%s411 + $0x58] sm:$0xff]
        %v424 = vld [vmem:[%s411 + $0x60] sm:$0xff]
        %v425 = vld [vmem:[%s411 + $0x68] sm:$0xff]
        %v426 = vld [vmem:[%s411 + $0x70] sm:$0xff]
        %v427 = vld [vmem:[%s411 + $0x78] sm:$0xff]
        %s428 = sadd.s32 %s300, %s371
        %s429 = smul.u32 %s428, 9
        %vm430 = vcmask 261120
        %v432 = vsel %vm430, %v378, 0
        %v435 = vsel %vm430, %v379, 0
        %v438 = vsel %vm430, %v380, 0
        %v441 = vsel %vm430, %v381, 0
        %v444 = vsel %vm430, %v382, 0
        %v447 = vsel %vm430, %v383, 0
        %v450 = vsel %vm430, %v384, 0
        %v453 = vsel %vm430, %v385, 0
        %v456 = vsel %vm430, %v386, 0
        %v459 = vsel %vm430, %v387, 0
        %v462 = vsel %vm430, %v388, 0
        %v465 = vsel %vm430, %v389, 0
        %v468 = vsel %vm430, %v390, 0
        %v471 = vsel %vm430, %v391, 0
        %v474 = vsel %vm430, %v392, 0
        %v477 = vsel %vm430, %v393, 0
        %v480 = vsel %vm430, %v395, 0
        %v483 = vsel %vm430, %v396, 0
        %v486 = vsel %vm430, %v397, 0
        %v489 = vsel %vm430, %v398, 0
        %v492 = vsel %vm430, %v399, 0
        %v495 = vsel %vm430, %v400, 0
        %v498 = vsel %vm430, %v401, 0
        %v501 = vsel %vm430, %v402, 0
        %v504 = vsel %vm430, %v403, 0
        %v507 = vsel %vm430, %v404, 0
        %v510 = vsel %vm430, %v405, 0
        %v513 = vsel %vm430, %v406, 0
        %v516 = vsel %vm430, %v407, 0
        %v519 = vsel %vm430, %v408, 0
        %v522 = vsel %vm430, %v409, 0
        %v525 = vsel %vm430, %v410, 0
        %527 = vmatprep.subr.mxu0 0.0
        %528 = vmatpush1.xpose.msra.mxu0 %v480
        %529 = vmatprep.subr.mxu0 0.0
        %530 = vmatpush1.xpose.msra.mxu0 %v483
        %531 = vmatprep.subr.mxu0 0.0
        %532 = vmatpush1.xpose.msra.mxu0 %v486
        %533 = vmatprep.subr.mxu0 0.0
        %534 = vmatpush1.xpose.msra.mxu0 %v489
        %535 = vmatprep.subr.mxu0 0.0
        %536 = vmatpush1.xpose.msra.mxu0 %v492
        %537 = vmatprep.subr.mxu0 0.0
        %538 = vmatpush1.xpose.msra.mxu0 %v495
        %539 = vmatprep.subr.mxu0 0.0
        %540 = vmatpush1.xpose.msra.mxu0 %v498
        %541 = vmatprep.subr.mxu0 0.0
        %542 = vmatpush1.xpose.msra.mxu0 %v501
        %543 = vmatprep.subr.mxu0 0.0
        %544 = vmatpush1.xpose.msra.mxu0 %v504
        %545 = vmatprep.subr.mxu0 0.0
        %546 = vmatpush1.xpose.msra.mxu0 %v507
        %547 = vmatprep.subr.mxu0 0.0
        %548 = vmatpush1.xpose.msra.mxu0 %v510
        %549 = vmatprep.subr.mxu0 0.0
        %550 = vmatpush1.xpose.msra.mxu0 %v513
        %551 = vmatprep.subr.mxu0 0.0
        %552 = vmatpush1.xpose.msra.mxu0 %v516
        %553 = vmatprep.subr.mxu0 0.0
        %554 = vmatpush1.xpose.msra.mxu0 %v519
        %555 = vmatprep.subr.mxu0 0.0
        %556 = vmatpush1.xpose.msra.mxu0 %v522
        %557 = vmatprep.subr.mxu0 0.0
        %558 = vmatpush1.xpose.msra.mxu0 %v525
        %559 = vmatprep.subr.mxu0 0.0
        %560 = vmatpush1.xpose.msra.mxu0 0.0
        %561 = vmatprep.subr.mxu0 0.0
        %562 = vmatpush1.xpose.msra.mxu0 0.0
        %563 = vmatprep.subr.mxu0 0.0
        %564 = vmatpush1.xpose.msra.mxu0 0.0
        %565 = vmatprep.subr.mxu0 0.0
        %566 = vmatpush1.xpose.msra.mxu0 0.0
        %567 = vmatprep.subr.mxu0 0.0
        %568 = vmatpush1.xpose.msra.mxu0 0.0
        %569 = vmatprep.subr.mxu0 0.0
        %570 = vmatpush1.xpose.msra.mxu0 0.0
        %571 = vmatprep.subr.mxu0 0.0
        %572 = vmatpush1.xpose.msra.mxu0 0.0
        %573 = vmatprep.subr.mxu0 0.0
        %574 = vmatpush1.xpose.msra.mxu0 0.0
        %575 = vmatprep.subr.mxu0 0.0
        %576 = vmatpush1.xpose.msra.mxu0 0.0
        %577 = vmatprep.subr.mxu0 0.0
        %578 = vmatpush1.xpose.msra.mxu0 0.0
        %579 = vmatprep.subr.mxu0 0.0
        %580 = vmatpush1.xpose.msra.mxu0 0.0
        %581 = vmatprep.subr.mxu0 0.0
        %582 = vmatpush1.xpose.msra.mxu0 0.0
        %583 = vmatprep.subr.mxu0 0.0
        %584 = vmatpush1.xpose.msra.mxu0 0.0
        %585 = vmatprep.subr.mxu0 0.0
        %586 = vmatpush1.xpose.msra.mxu0 0.0
        %587 = vmatprep.subr.mxu0 0.0
        %588 = vmatpush1.xpose.msra.mxu0 0.0
        %589 = vmatprep.subr.mxu0 0.0
        %590 = vmatpush1.xpose.msra.mxu0 0.0
        %591 = vmatprep.mubr.f32.mxu0 0.0
        %592 = vmatmul.mubr.f32.gmra.mrb[0].mxu0 %v432
        %v593 = vpop.f32.mrb[0].mxu0
        %v594 = vadd.f32 0.0, %v593
        %v595 = vpop.f32.mrb[0].mxu0
        %596 = vmatprep.mubr.f32.mxu0 0.0
        %597 = vmatmul.mubr.f32.gmra.mrb[0].mxu0 %v435
        %v598 = vpop.f32.mrb[0].mxu0
        %v599 = vadd.f32 0.0, %v598
        %v600 = vpop.f32.mrb[0].mxu0
        %601 = vmatprep.mubr.f32.mxu0 0.0
        %602 = vmatmul.mubr.f32.gmra.mrb[0].mxu0 %v438
        %v603 = vpop.f32.mrb[0].mxu0
        %v604 = vadd.f32 0.0, %v603
        %v605 = vpop.f32.mrb[0].mxu0
        %606 = vmatprep.mubr.f32.mxu0 0.0
        %607 = vmatmul.mubr.f32.gmra.mrb[0].mxu0 %v441
        %v608 = vpop.f32.mrb[0].mxu0
        %v609 = vadd.f32 0.0, %v608
        %v610 = vpop.f32.mrb[0].mxu0
        %611 = vmatprep.mubr.f32.mxu0 0.0
        %612 = vmatmul.mubr.f32.gmra.mrb[0].mxu0 %v444
        %v613 = vpop.f32.mrb[0].mxu0
        %v614 = vadd.f32 0.0, %v613
        %v615 = vpop.f32.mrb[0].mxu0
        %616 = vmatprep.mubr.f32.mxu0 0.0
        %617 = vmatmul.mubr.f32.gmra.mrb[0].mxu0 %v447
        %v618 = vpop.f32.mrb[0].mxu0
        %v619 = vadd.f32 0.0, %v618
        %v620 = vpop.f32.mrb[0].mxu0
        %621 = vmatprep.mubr.f32.mxu0 0.0
        %622 = vmatmul.mubr.f32.gmra.mrb[0].mxu0 %v450
        %v623 = vpop.f32.mrb[0].mxu0
        %v624 = vadd.f32 0.0, %v623
        %v625 = vpop.f32.mrb[0].mxu0
        %626 = vmatprep.mubr.f32.mxu0 0.0
        %627 = vmatmul.mubr.f32.gmra.mrb[0].mxu0 %v453
        %v628 = vpop.f32.mrb[0].mxu0
        %v629 = vadd.f32 0.0, %v628
        %v630 = vpop.f32.mrb[0].mxu0
        %631 = vmatprep.mubr.f32.mxu0 0.0
        %632 = vmatmul.mubr.f32.gmra.mrb[0].mxu0 %v456
        %v633 = vpop.f32.mrb[0].mxu0
        %v634 = vadd.f32 0.0, %v633
        %v635 = vpop.f32.mrb[0].mxu0
        %636 = vmatprep.mubr.f32.mxu0 0.0
        %637 = vmatmul.mubr.f32.gmra.mrb[0].mxu0 %v459
        %v638 = vpop.f32.mrb[0].mxu0
        %v639 = vadd.f32 0.0, %v638
        %v640 = vpop.f32.mrb[0].mxu0
        %641 = vmatprep.mubr.f32.mxu0 0.0
        %642 = vmatmul.mubr.f32.gmra.mrb[0].mxu0 %v462
        %v643 = vpop.f32.mrb[0].mxu0
        %v644 = vadd.f32 0.0, %v643
        %v645 = vpop.f32.mrb[0].mxu0
        %646 = vmatprep.mubr.f32.mxu0 0.0
        %647 = vmatmul.mubr.f32.gmra.mrb[0].mxu0 %v465
        %v648 = vpop.f32.mrb[0].mxu0
        %v649 = vadd.f32 0.0, %v648
        %v650 = vpop.f32.mrb[0].mxu0
        %651 = vmatprep.mubr.f32.mxu0 0.0
        %652 = vmatmul.mubr.f32.gmra.mrb[0].mxu0 %v468
        %v653 = vpop.f32.mrb[0].mxu0
        %v654 = vadd.f32 0.0, %v653
        %v655 = vpop.f32.mrb[0].mxu0
        %656 = vmatprep.mubr.f32.mxu0 0.0
        %657 = vmatmul.mubr.f32.gmra.mrb[0].mxu0 %v471
        %v658 = vpop.f32.mrb[0].mxu0
        %v659 = vadd.f32 0.0, %v658
        %v660 = vpop.f32.mrb[0].mxu0
        %661 = vmatprep.mubr.f32.mxu0 0.0
        %662 = vmatmul.mubr.f32.gmra.mrb[0].mxu0 %v474
        %v663 = vpop.f32.mrb[0].mxu0
        %v664 = vadd.f32 0.0, %v663
        %v665 = vpop.f32.mrb[0].mxu0
        %666 = vmatprep.mubr.f32.mxu0 0.0
        %667 = vmatmul.mubr.f32.gmra.mrb[0].mxu0 %v477
        %v668 = vpop.f32.mrb[0].mxu0
        %v669 = vadd.f32 0.0, %v668
        %v670 = vpop.f32.mrb[0].mxu0
        %671 = vdwg.mxu0
        %v672 = vsel %vm320, 0.0, %v594
        %v673 = vsel %vm321, 0.0, %v599
        %v674 = vsel %vm322, 0.0, %v604
        %v675 = vsel %vm323, 0.0, %v609
        %v676 = vsel %vm324, 0.0, %v614
        %v677 = vsel %vm325, 0.0, %v619
        %v678 = vsel %vm326, 0.0, %v624
        %v679 = vsel %vm327, 0.0, %v629
        %v680 = vsel %vm328, 0.0, %v634
        %v681 = vsel %vm329, 0.0, %v639
        %v682 = vsel %vm330, 0.0, %v644
        %v683 = vsel %vm331, 0.0, %v649
        %v684 = vsel %vm332, 0.0, %v654
        %v685 = vsel %vm333, 0.0, %v659
        %v686 = vsel %vm334, 0.0, %v664
        %v687 = vsel %vm335, 0.0, %v669
        %s688 = sadd.s32 %s429, 7
        %s689 = sld [smem:[#allocation3 + %s688]]
        %v690 = vstv %s689
        %v691 = vmul.f32 %v690, %v672
        %v692 = vmul.f32 %v690, %v673
        %v693 = vmul.f32 %v690, %v674
        %v694 = vmul.f32 %v690, %v675
        %v695 = vmul.f32 %v690, %v676
        %v696 = vmul.f32 %v690, %v677
        %v697 = vmul.f32 %v690, %v678
        %v698 = vmul.f32 %v690, %v679
        %v699 = vmul.f32 %v690, %v680
        %v700 = vmul.f32 %v690, %v681
        %v701 = vmul.f32 %v690, %v682
        %v702 = vmul.f32 %v690, %v683
        %v703 = vmul.f32 %v690, %v684
        %v704 = vmul.f32 %v690, %v685
        %v705 = vmul.f32 %v690, %v686
        %v706 = vmul.f32 %v690, %v687
        %707 = vrot.lane.b32.xlu0 %v672, 1
        %v708 = vpop.permute.xlu0 %707
        %709 = vrot.lane.b32.xlu0 %v673, 1
        %v710 = vpop.permute.xlu0 %709
        %711 = vrot.lane.b32.xlu0 %v674, 1
        %v712 = vpop.permute.xlu0 %711
        %713 = vrot.lane.b32.xlu0 %v675, 1
        %v714 = vpop.permute.xlu0 %713
        %715 = vrot.lane.b32.xlu0 %v676, 1
        %v716 = vpop.permute.xlu0 %715
        %717 = vrot.lane.b32.xlu0 %v677, 1
        %v718 = vpop.permute.xlu0 %717
        %719 = vrot.lane.b32.xlu0 %v678, 1
        %v720 = vpop.permute.xlu0 %719
        %721 = vrot.lane.b32.xlu0 %v679, 1
        %v722 = vpop.permute.xlu0 %721
        %723 = vrot.lane.b32.xlu0 %v680, 1
        %v724 = vpop.permute.xlu0 %723
        %725 = vrot.lane.b32.xlu0 %v681, 1
        %v726 = vpop.permute.xlu0 %725
        %727 = vrot.lane.b32.xlu0 %v682, 1
        %v728 = vpop.permute.xlu0 %727
        %729 = vrot.lane.b32.xlu0 %v683, 1
        %v730 = vpop.permute.xlu0 %729
        %731 = vrot.lane.b32.xlu0 %v684, 1
        %v732 = vpop.permute.xlu0 %731
        %733 = vrot.lane.b32.xlu0 %v685, 1
        %v734 = vpop.permute.xlu0 %733
        %735 = vrot.lane.b32.xlu0 %v686, 1
        %v736 = vpop.permute.xlu0 %735
        %737 = vrot.lane.b32.xlu0 %v687, 1
        %v738 = vpop.permute.xlu0 %737
        %v739 = vsel %vm368, 1, 0
        %vm740 = vcmp.eq.s32.totalorder %v739, 1
        %v741 = vsel %vm740, %v708, 0.0
        %v742 = vsel %vm740, %v710, 0.0
        %v743 = vsel %vm740, %v712, 0.0
        %v744 = vsel %vm740, %v714, 0.0
        %v745 = vsel %vm740, %v716, 0.0
        %v746 = vsel %vm740, %v718, 0.0
        %v747 = vsel %vm740, %v720, 0.0
        %v748 = vsel %vm740, %v722, 0.0
        %v749 = vsel %vm740, %v724, 0.0
        %v750 = vsel %vm740, %v726, 0.0
        %v751 = vsel %vm740, %v728, 0.0
        %v752 = vsel %vm740, %v730, 0.0
        %v753 = vsel %vm740, %v732, 0.0
        %v754 = vsel %vm740, %v734, 0.0
        %v755 = vsel %vm740, %v736, 0.0
        %v756 = vsel %vm740, %v738, 0.0
        %s757 = sadd.s32 %s429, 6
        %s758 = sld [smem:[#allocation3 + %s757]]
        %v759 = vstv %s758
        %v760 = vmul.f32 %v759, %v741
        %v761 = vmul.f32 %v759, %v742
        %v762 = vmul.f32 %v759, %v743
        %v763 = vmul.f32 %v759, %v744
        %v764 = vmul.f32 %v759, %v745
        %v765 = vmul.f32 %v759, %v746
        %v766 = vmul.f32 %v759, %v747
        %v767 = vmul.f32 %v759, %v748
        %v768 = vmul.f32 %v759, %v749
        %v769 = vmul.f32 %v759, %v750
        %v770 = vmul.f32 %v759, %v751
        %v771 = vmul.f32 %v759, %v752
        %v772 = vmul.f32 %v759, %v753
        %v773 = vmul.f32 %v759, %v754
        %v774 = vmul.f32 %v759, %v755
        %v775 = vmul.f32 %v759, %v756
        %v776 = vadd.f32 %v691, %v760
        %v777 = vadd.f32 %v692, %v761
        %v778 = vadd.f32 %v693, %v762
        %v779 = vadd.f32 %v694, %v763
        %v780 = vadd.f32 %v695, %v764
        %v781 = vadd.f32 %v696, %v765
        %v782 = vadd.f32 %v697, %v766
        %v783 = vadd.f32 %v698, %v767
        %v784 = vadd.f32 %v699, %v768
        %v785 = vadd.f32 %v700, %v769
        %v786 = vadd.f32 %v701, %v770
        %v787 = vadd.f32 %v702, %v771
        %v788 = vadd.f32 %v703, %v772
        %v789 = vadd.f32 %v704, %v773
        %v790 = vadd.f32 %v705, %v774
        %v791 = vadd.f32 %v706, %v775
        %792 = vrot.lane.b32.xlu0 %v672, 127
        %v793 = vpop.permute.xlu0 %792
        %794 = vrot.lane.b32.xlu0 %v673, 127
        %v795 = vpop.permute.xlu0 %794
        %796 = vrot.lane.b32.xlu0 %v674, 127
        %v797 = vpop.permute.xlu0 %796
        %798 = vrot.lane.b32.xlu0 %v675, 127
        %v799 = vpop.permute.xlu0 %798
        %800 = vrot.lane.b32.xlu0 %v676, 127
        %v801 = vpop.permute.xlu0 %800
        %802 = vrot.lane.b32.xlu0 %v677, 127
        %v803 = vpop.permute.xlu0 %802
        %804 = vrot.lane.b32.xlu0 %v678, 127
        %v805 = vpop.permute.xlu0 %804
        %806 = vrot.lane.b32.xlu0 %v679, 127
        %v807 = vpop.permute.xlu0 %806
        %808 = vrot.lane.b32.xlu0 %v680, 127
        %v809 = vpop.permute.xlu0 %808
        %810 = vrot.lane.b32.xlu0 %v681, 127
        %v811 = vpop.permute.xlu0 %810
        %812 = vrot.lane.b32.xlu0 %v682, 127
        %v813 = vpop.permute.xlu0 %812
        %814 = vrot.lane.b32.xlu0 %v683, 127
        %v815 = vpop.permute.xlu0 %814
        %816 = vrot.lane.b32.xlu0 %v684, 127
        %v817 = vpop.permute.xlu0 %816
        %818 = vrot.lane.b32.xlu0 %v685, 127
        %v819 = vpop.permute.xlu0 %818
        %820 = vrot.lane.b32.xlu0 %v686, 127
        %v821 = vpop.permute.xlu0 %820
        %822 = vrot.lane.b32.xlu0 %v687, 127
        %v823 = vpop.permute.xlu0 %822
        %v824 = vsel %vm369, 1, 0
        %vm825 = vcmp.eq.s32.totalorder %v824, 1
        %v826 = vsel %vm825, %v793, 0.0
        %v827 = vsel %vm825, %v795, 0.0
        %v828 = vsel %vm825, %v797, 0.0
        %v829 = vsel %vm825, %v799, 0.0
        %v830 = vsel %vm825, %v801, 0.0
        %v831 = vsel %vm825, %v803, 0.0
        %v832 = vsel %vm825, %v805, 0.0
        %v833 = vsel %vm825, %v807, 0.0
        %v834 = vsel %vm825, %v809, 0.0
        %v835 = vsel %vm825, %v811, 0.0
        %v836 = vsel %vm825, %v813, 0.0
        %v837 = vsel %vm825, %v815, 0.0
        %v838 = vsel %vm825, %v817, 0.0
        %v839 = vsel %vm825, %v819, 0.0
        %v840 = vsel %vm825, %v821, 0.0
        %v841 = vsel %vm825, %v823, 0.0
        %s842 = sadd.s32 %s429, 8
        %s843 = sld [smem:[#allocation3 + %s842]]
        %v844 = vstv %s843
        %v845 = vmul.f32 %v844, %v826
        %v846 = vmul.f32 %v844, %v827
        %v847 = vmul.f32 %v844, %v828
        %v848 = vmul.f32 %v844, %v829
        %v849 = vmul.f32 %v844, %v830
        %v850 = vmul.f32 %v844, %v831
        %v851 = vmul.f32 %v844, %v832
        %v852 = vmul.f32 %v844, %v833
        %v853 = vmul.f32 %v844, %v834
        %v854 = vmul.f32 %v844, %v835
        %v855 = vmul.f32 %v844, %v836
        %v856 = vmul.f32 %v844, %v837
        %v857 = vmul.f32 %v844, %v838
        %v858 = vmul.f32 %v844, %v839
        %v859 = vmul.f32 %v844, %v840
        %v860 = vmul.f32 %v844, %v841
        %v861 = vadd.f32 %v776, %v845
        %v862 = vadd.f32 %v777, %v846
        %v863 = vadd.f32 %v778, %v847
        %v864 = vadd.f32 %v779, %v848
        %v865 = vadd.f32 %v780, %v849
        %v866 = vadd.f32 %v781, %v850
        %v867 = vadd.f32 %v782, %v851
        %v868 = vadd.f32 %v783, %v852
        %v869 = vadd.f32 %v784, %v853
        %v870 = vadd.f32 %v785, %v854
        %v871 = vadd.f32 %v786, %v855
        %v872 = vadd.f32 %v787, %v856
        %v873 = vadd.f32 %v788, %v857
        %v874 = vadd.f32 %v789, %v858
        %v875 = vadd.f32 %v790, %v859
        %v876 = vadd.f32 %v791, %v860
        %v877 = vrot.slane %v672, 6
        %v878 = vrot.slane %v673, 6
        %v879 = vrot.slane %v674, 6
        %v880 = vrot.slane %v675, 6
        %v881 = vrot.slane %v676, 6
        %v882 = vrot.slane %v677, 6
        %v883 = vrot.slane %v678, 6
        %v884 = vrot.slane %v679, 6
        %v885 = vrot.slane %v680, 6
        %v886 = vrot.slane %v681, 6
        %v887 = vrot.slane %v682, 6
        %v888 = vrot.slane %v683, 6
        %v889 = vrot.slane %v684, 6
        %v890 = vrot.slane %v685, 6
        %v891 = vrot.slane %v686, 6
        %v892 = vrot.slane %v687, 6
        %vm893 = vcmp.lt.s32.totalorder %v302, 2
        %v894 = vsel %vm893, %v891, %v892
        %v895 = vsel %vm893, %v890, %v891
        %v896 = vsel %vm893, %v889, %v890
        %v897 = vsel %vm893, %v888, %v889
        %v898 = vsel %vm893, %v887, %v888
        %v899 = vsel %vm893, %v886, %v887
        %v900 = vsel %vm893, %v885, %v886
        %v901 = vsel %vm893, %v884, %v885
        %v902 = vsel %vm893, %v883, %v884
        %v903 = vsel %vm893, %v882, %v883
        %v904 = vsel %vm893, %v881, %v882
        %v905 = vsel %vm893, %v880, %v881
        %v906 = vsel %vm893, %v879, %v880
        %v907 = vsel %vm893, %v878, %v879
        %v908 = vsel %vm893, %v877, %v878
        %v909 = vsel %vm893, %v892, %v877
        %v910 = vsel %vm336, 1, 0
        %v911 = vsel %vm337, 1, 0
        %v912 = vsel %vm338, 1, 0
        %v913 = vsel %vm339, 1, 0
        %v914 = vsel %vm340, 1, 0
        %v915 = vsel %vm341, 1, 0
        %v916 = vsel %vm342, 1, 0
        %v917 = vsel %vm343, 1, 0
        %v918 = vsel %vm344, 1, 0
        %v919 = vsel %vm345, 1, 0
        %v920 = vsel %vm346, 1, 0
        %v921 = vsel %vm347, 1, 0
        %v922 = vsel %vm348, 1, 0
        %v923 = vsel %vm349, 1, 0
        %v924 = vsel %vm350, 1, 0
        %v925 = vsel %vm351, 1, 0
        %vm926 = vcmp.eq.s32.totalorder %v910, 1
        %vm927 = vcmp.eq.s32.totalorder %v911, 1
        %vm928 = vcmp.eq.s32.totalorder %v912, 1
        %vm929 = vcmp.eq.s32.totalorder %v913, 1
        %vm930 = vcmp.eq.s32.totalorder %v914, 1
        %vm931 = vcmp.eq.s32.totalorder %v915, 1
        %vm932 = vcmp.eq.s32.totalorder %v916, 1
        %vm933 = vcmp.eq.s32.totalorder %v917, 1
        %vm934 = vcmp.eq.s32.totalorder %v918, 1
        %vm935 = vcmp.eq.s32.totalorder %v919, 1
        %vm936 = vcmp.eq.s32.totalorder %v920, 1
        %vm937 = vcmp.eq.s32.totalorder %v921, 1
        %vm938 = vcmp.eq.s32.totalorder %v922, 1
        %vm939 = vcmp.eq.s32.totalorder %v923, 1
        %vm940 = vcmp.eq.s32.totalorder %v924, 1
        %vm941 = vcmp.eq.s32.totalorder %v925, 1
        %v942 = vsel %vm926, %v909, 0.0
        %v943 = vsel %vm927, %v908, 0.0
        %v944 = vsel %vm928, %v907, 0.0
        %v945 = vsel %vm929, %v906, 0.0
        %v946 = vsel %vm930, %v905, 0.0
        %v947 = vsel %vm931, %v904, 0.0
        %v948 = vsel %vm932, %v903, 0.0
        %v949 = vsel %vm933, %v902, 0.0
        %v950 = vsel %vm934, %v901, 0.0
        %v951 = vsel %vm935, %v900, 0.0
        %v952 = vsel %vm936, %v899, 0.0
        %v953 = vsel %vm937, %v898, 0.0
        %v954 = vsel %vm938, %v897, 0.0
        %v955 = vsel %vm939, %v896, 0.0
        %v956 = vsel %vm940, %v895, 0.0
        %v957 = vsel %vm941, %v894, 0.0
        %958 = vrot.lane.b32.xlu0 %v942, 1
        %v959 = vpop.permute.xlu0 %958
        %960 = vrot.lane.b32.xlu0 %v943, 1
        %v961 = vpop.permute.xlu0 %960
        %962 = vrot.lane.b32.xlu0 %v944, 1
        %v963 = vpop.permute.xlu0 %962
        %964 = vrot.lane.b32.xlu0 %v945, 1
        %v965 = vpop.permute.xlu0 %964
        %966 = vrot.lane.b32.xlu0 %v946, 1
        %v967 = vpop.permute.xlu0 %966
        %968 = vrot.lane.b32.xlu0 %v947, 1
        %v969 = vpop.permute.xlu0 %968
        %970 = vrot.lane.b32.xlu0 %v948, 1
        %v971 = vpop.permute.xlu0 %970
        %972 = vrot.lane.b32.xlu0 %v949, 1
        %v973 = vpop.permute.xlu0 %972
        %974 = vrot.lane.b32.xlu0 %v950, 1
        %v975 = vpop.permute.xlu0 %974
        %976 = vrot.lane.b32.xlu0 %v951, 1
        %v977 = vpop.permute.xlu0 %976
        %978 = vrot.lane.b32.xlu0 %v952, 1
        %v979 = vpop.permute.xlu0 %978
        %980 = vrot.lane.b32.xlu0 %v953, 1
        %v981 = vpop.permute.xlu0 %980
        %982 = vrot.lane.b32.xlu0 %v954, 1
        %v983 = vpop.permute.xlu0 %982
        %984 = vrot.lane.b32.xlu0 %v955, 1
        %v985 = vpop.permute.xlu0 %984
        %986 = vrot.lane.b32.xlu0 %v956, 1
        %v987 = vpop.permute.xlu0 %986
        %988 = vrot.lane.b32.xlu0 %v957, 1
        %v989 = vpop.permute.xlu0 %988
        %v990 = vsel %vm740, %v959, 0.0
        %v991 = vsel %vm740, %v961, 0.0
        %v992 = vsel %vm740, %v963, 0.0
        %v993 = vsel %vm740, %v965, 0.0
        %v994 = vsel %vm740, %v967, 0.0
        %v995 = vsel %vm740, %v969, 0.0
        %v996 = vsel %vm740, %v971, 0.0
        %v997 = vsel %vm740, %v973, 0.0
        %v998 = vsel %vm740, %v975, 0.0
        %v999 = vsel %vm740, %v977, 0.0
        %v1000 = vsel %vm740, %v979, 0.0
        %v1001 = vsel %vm740, %v981, 0.0
        %v1002 = vsel %vm740, %v983, 0.0
        %v1003 = vsel %vm740, %v985, 0.0
        %v1004 = vsel %vm740, %v987, 0.0
        %v1005 = vsel %vm740, %v989, 0.0
        %s1006 = sld [smem:[#allocation3 + %s429]]
        %v1007 = vstv %s1006
        %v1008 = vmul.f32 %v1007, %v990
        %v1009 = vmul.f32 %v1007, %v991
        %v1010 = vmul.f32 %v1007, %v992
        %v1011 = vmul.f32 %v1007, %v993
        %v1012 = vmul.f32 %v1007, %v994
        %v1013 = vmul.f32 %v1007, %v995
        %v1014 = vmul.f32 %v1007, %v996
        %v1015 = vmul.f32 %v1007, %v997
        %v1016 = vmul.f32 %v1007, %v998
        %v1017 = vmul.f32 %v1007, %v999
        %v1018 = vmul.f32 %v1007, %v1000
        %v1019 = vmul.f32 %v1007, %v1001
        %v1020 = vmul.f32 %v1007, %v1002
        %v1021 = vmul.f32 %v1007, %v1003
        %v1022 = vmul.f32 %v1007, %v1004
        %v1023 = vmul.f32 %v1007, %v1005
        %v1024 = vadd.f32 %v861, %v1008
        %v1025 = vadd.f32 %v862, %v1009
        %v1026 = vadd.f32 %v863, %v1010
        %v1027 = vadd.f32 %v864, %v1011
        %v1028 = vadd.f32 %v865, %v1012
        %v1029 = vadd.f32 %v866, %v1013
        %v1030 = vadd.f32 %v867, %v1014
        %v1031 = vadd.f32 %v868, %v1015
        %v1032 = vadd.f32 %v869, %v1016
        %v1033 = vadd.f32 %v870, %v1017
        %v1034 = vadd.f32 %v871, %v1018
        %v1035 = vadd.f32 %v872, %v1019
        %v1036 = vadd.f32 %v873, %v1020
        %v1037 = vadd.f32 %v874, %v1021
        %v1038 = vadd.f32 %v875, %v1022
        %v1039 = vadd.f32 %v876, %v1023
        %s1040 = sadd.s32 %s429, 1
        %s1041 = sld [smem:[#allocation3 + %s1040]]
        %v1042 = vstv %s1041
        %v1043 = vmul.f32 %v1042, %v942
        %v1044 = vmul.f32 %v1042, %v943
        %v1045 = vmul.f32 %v1042, %v944
        %v1046 = vmul.f32 %v1042, %v945
        %v1047 = vmul.f32 %v1042, %v946
        %v1048 = vmul.f32 %v1042, %v947
        %v1049 = vmul.f32 %v1042, %v948
        %v1050 = vmul.f32 %v1042, %v949
        %v1051 = vmul.f32 %v1042, %v950
        %v1052 = vmul.f32 %v1042, %v951
        %v1053 = vmul.f32 %v1042, %v952
        %v1054 = vmul.f32 %v1042, %v953
        %v1055 = vmul.f32 %v1042, %v954
        %v1056 = vmul.f32 %v1042, %v955
        %v1057 = vmul.f32 %v1042, %v956
        %v1058 = vmul.f32 %v1042, %v957
        %v1059 = vadd.f32 %v1024, %v1043
        %v1060 = vadd.f32 %v1025, %v1044
        %v1061 = vadd.f32 %v1026, %v1045
        %v1062 = vadd.f32 %v1027, %v1046
        %v1063 = vadd.f32 %v1028, %v1047
        %v1064 = vadd.f32 %v1029, %v1048
        %v1065 = vadd.f32 %v1030, %v1049
        %v1066 = vadd.f32 %v1031, %v1050
        %v1067 = vadd.f32 %v1032, %v1051
        %v1068 = vadd.f32 %v1033, %v1052
        %v1069 = vadd.f32 %v1034, %v1053
        %v1070 = vadd.f32 %v1035, %v1054
        %v1071 = vadd.f32 %v1036, %v1055
        %v1072 = vadd.f32 %v1037, %v1056
        %v1073 = vadd.f32 %v1038, %v1057
        %v1074 = vadd.f32 %v1039, %v1058
        %1075 = vrot.lane.b32.xlu0 %v942, 127
        %v1076 = vpop.permute.xlu0 %1075
        %1077 = vrot.lane.b32.xlu0 %v943, 127
        %v1078 = vpop.permute.xlu0 %1077
        %1079 = vrot.lane.b32.xlu0 %v944, 127
        %v1080 = vpop.permute.xlu0 %1079
        %1081 = vrot.lane.b32.xlu0 %v945, 127
        %v1082 = vpop.permute.xlu0 %1081
        %1083 = vrot.lane.b32.xlu0 %v946, 127
        %v1084 = vpop.permute.xlu0 %1083
        %1085 = vrot.lane.b32.xlu0 %v947, 127
        %v1086 = vpop.permute.xlu0 %1085
        %1087 = vrot.lane.b32.xlu0 %v948, 127
        %v1088 = vpop.permute.xlu0 %1087
        %1089 = vrot.lane.b32.xlu0 %v949, 127
        %v1090 = vpop.permute.xlu0 %1089
        %1091 = vrot.lane.b32.xlu0 %v950, 127
        %v1092 = vpop.permute.xlu0 %1091
        %1093 = vrot.lane.b32.xlu0 %v951, 127
        %v1094 = vpop.permute.xlu0 %1093
        %1095 = vrot.lane.b32.xlu0 %v952, 127
        %v1096 = vpop.permute.xlu0 %1095
        %1097 = vrot.lane.b32.xlu0 %v953, 127
        %v1098 = vpop.permute.xlu0 %1097
        %1099 = vrot.lane.b32.xlu0 %v954, 127
        %v1100 = vpop.permute.xlu0 %1099
        %1101 = vrot.lane.b32.xlu0 %v955, 127
        %v1102 = vpop.permute.xlu0 %1101
        %1103 = vrot.lane.b32.xlu0 %v956, 127
        %v1104 = vpop.permute.xlu0 %1103
        %1105 = vrot.lane.b32.xlu0 %v957, 127
        %v1106 = vpop.permute.xlu0 %1105
        %v1107 = vsel %vm825, %v1076, 0.0
        %v1108 = vsel %vm825, %v1078, 0.0
        %v1109 = vsel %vm825, %v1080, 0.0
        %v1110 = vsel %vm825, %v1082, 0.0
        %v1111 = vsel %vm825, %v1084, 0.0
        %v1112 = vsel %vm825, %v1086, 0.0
        %v1113 = vsel %vm825, %v1088, 0.0
        %v1114 = vsel %vm825, %v1090, 0.0
        %v1115 = vsel %vm825, %v1092, 0.0
        %v1116 = vsel %vm825, %v1094, 0.0
        %v1117 = vsel %vm825, %v1096, 0.0
        %v1118 = vsel %vm825, %v1098, 0.0
        %v1119 = vsel %vm825, %v1100, 0.0
        %v1120 = vsel %vm825, %v1102, 0.0
        %v1121 = vsel %vm825, %v1104, 0.0
        %v1122 = vsel %vm825, %v1106, 0.0
        %s1123 = sadd.s32 %s429, 2
        %s1124 = sld [smem:[#allocation3 + %s1123]]
        %v1125 = vstv %s1124
        %v1126 = vmul.f32 %v1125, %v1107
        %v1127 = vmul.f32 %v1125, %v1108
        %v1128 = vmul.f32 %v1125, %v1109
        %v1129 = vmul.f32 %v1125, %v1110
        %v1130 = vmul.f32 %v1125, %v1111
        %v1131 = vmul.f32 %v1125, %v1112
        %v1132 = vmul.f32 %v1125, %v1113
        %v1133 = vmul.f32 %v1125, %v1114
        %v1134 = vmul.f32 %v1125, %v1115
        %v1135 = vmul.f32 %v1125, %v1116
        %v1136 = vmul.f32 %v1125, %v1117
        %v1137 = vmul.f32 %v1125, %v1118
        %v1138 = vmul.f32 %v1125, %v1119
        %v1139 = vmul.f32 %v1125, %v1120
        %v1140 = vmul.f32 %v1125, %v1121
        %v1141 = vmul.f32 %v1125, %v1122
        %v1142 = vadd.f32 %v1059, %v1126
        %v1143 = vadd.f32 %v1060, %v1127
        %v1144 = vadd.f32 %v1061, %v1128
        %v1145 = vadd.f32 %v1062, %v1129
        %v1146 = vadd.f32 %v1063, %v1130
        %v1147 = vadd.f32 %v1064, %v1131
        %v1148 = vadd.f32 %v1065, %v1132
        %v1149 = vadd.f32 %v1066, %v1133
        %v1150 = vadd.f32 %v1067, %v1134
        %v1151 = vadd.f32 %v1068, %v1135
        %v1152 = vadd.f32 %v1069, %v1136
        %v1153 = vadd.f32 %v1070, %v1137
        %v1154 = vadd.f32 %v1071, %v1138
        %v1155 = vadd.f32 %v1072, %v1139
        %v1156 = vadd.f32 %v1073, %v1140
        %v1157 = vadd.f32 %v1074, %v1141
        %v1158 = vrot.slane %v672, 7
        %v1159 = vrot.slane %v673, 7
        %v1160 = vrot.slane %v674, 7
        %v1161 = vrot.slane %v675, 7
        %v1162 = vrot.slane %v676, 7
        %v1163 = vrot.slane %v677, 7
        %v1164 = vrot.slane %v678, 7
        %v1165 = vrot.slane %v679, 7
        %v1166 = vrot.slane %v680, 7
        %v1167 = vrot.slane %v681, 7
        %v1168 = vrot.slane %v682, 7
        %v1169 = vrot.slane %v683, 7
        %v1170 = vrot.slane %v684, 7
        %v1171 = vrot.slane %v685, 7
        %v1172 = vrot.slane %v686, 7
        %v1173 = vrot.slane %v687, 7
        %vm1174 = vcmp.lt.s32.totalorder %v302, 1
        %v1175 = vsel %vm1174, %v1172, %v1173
        %v1176 = vsel %vm1174, %v1171, %v1172
        %v1177 = vsel %vm1174, %v1170, %v1171
        %v1178 = vsel %vm1174, %v1169, %v1170
        %v1179 = vsel %vm1174, %v1168, %v1169
        %v1180 = vsel %vm1174, %v1167, %v1168
        %v1181 = vsel %vm1174, %v1166, %v1167
        %v1182 = vsel %vm1174, %v1165, %v1166
        %v1183 = vsel %vm1174, %v1164, %v1165
        %v1184 = vsel %vm1174, %v1163, %v1164
        %v1185 = vsel %vm1174, %v1162, %v1163
        %v1186 = vsel %vm1174, %v1161, %v1162
        %v1187 = vsel %vm1174, %v1160, %v1161
        %v1188 = vsel %vm1174, %v1159, %v1160
        %v1189 = vsel %vm1174, %v1158, %v1159
        %v1190 = vsel %vm1174, %v1173, %v1158
        %v1191 = vsel %vm352, 1, 0
        %v1192 = vsel %vm353, 1, 0
        %v1193 = vsel %vm354, 1, 0
        %v1194 = vsel %vm355, 1, 0
        %v1195 = vsel %vm356, 1, 0
        %v1196 = vsel %vm357, 1, 0
        %v1197 = vsel %vm358, 1, 0
        %v1198 = vsel %vm359, 1, 0
        %v1199 = vsel %vm360, 1, 0
        %v1200 = vsel %vm361, 1, 0
        %v1201 = vsel %vm362, 1, 0
        %v1202 = vsel %vm363, 1, 0
        %v1203 = vsel %vm364, 1, 0
        %v1204 = vsel %vm365, 1, 0
        %v1205 = vsel %vm366, 1, 0
        %v1206 = vsel %vm367, 1, 0
        %vm1207 = vcmp.eq.s32.totalorder %v1191, 1
        %vm1208 = vcmp.eq.s32.totalorder %v1192, 1
        %vm1209 = vcmp.eq.s32.totalorder %v1193, 1
        %vm1210 = vcmp.eq.s32.totalorder %v1194, 1
        %vm1211 = vcmp.eq.s32.totalorder %v1195, 1
        %vm1212 = vcmp.eq.s32.totalorder %v1196, 1
        %vm1213 = vcmp.eq.s32.totalorder %v1197, 1
        %vm1214 = vcmp.eq.s32.totalorder %v1198, 1
        %vm1215 = vcmp.eq.s32.totalorder %v1199, 1
        %vm1216 = vcmp.eq.s32.totalorder %v1200, 1
        %vm1217 = vcmp.eq.s32.totalorder %v1201, 1
        %vm1218 = vcmp.eq.s32.totalorder %v1202, 1
        %vm1219 = vcmp.eq.s32.totalorder %v1203, 1
        %vm1220 = vcmp.eq.s32.totalorder %v1204, 1
        %vm1221 = vcmp.eq.s32.totalorder %v1205, 1
        %vm1222 = vcmp.eq.s32.totalorder %v1206, 1
        %v1223 = vsel %vm1207, %v1190, 0.0
        %v1224 = vsel %vm1208, %v1189, 0.0
        %v1225 = vsel %vm1209, %v1188, 0.0
        %v1226 = vsel %vm1210, %v1187, 0.0
        %v1227 = vsel %vm1211, %v1186, 0.0
        %v1228 = vsel %vm1212, %v1185, 0.0
        %v1229 = vsel %vm1213, %v1184, 0.0
        %v1230 = vsel %vm1214, %v1183, 0.0
        %v1231 = vsel %vm1215, %v1182, 0.0
        %v1232 = vsel %vm1216, %v1181, 0.0
        %v1233 = vsel %vm1217, %v1180, 0.0
        %v1234 = vsel %vm1218, %v1179, 0.0
        %v1235 = vsel %vm1219, %v1178, 0.0
        %v1236 = vsel %vm1220, %v1177, 0.0
        %v1237 = vsel %vm1221, %v1176, 0.0
        %v1238 = vsel %vm1222, %v1175, 0.0
        %1239 = vrot.lane.b32.xlu0 %v1223, 1
        %v1240 = vpop.permute.xlu0 %1239
        %1241 = vrot.lane.b32.xlu0 %v1224, 1
        %v1242 = vpop.permute.xlu0 %1241
        %1243 = vrot.lane.b32.xlu0 %v1225, 1
        %v1244 = vpop.permute.xlu0 %1243
        %1245 = vrot.lane.b32.xlu0 %v1226, 1
        %v1246 = vpop.permute.xlu0 %1245
        %1247 = vrot.lane.b32.xlu0 %v1227, 1
        %v1248 = vpop.permute.xlu0 %1247
        %1249 = vrot.lane.b32.xlu0 %v1228, 1
        %v1250 = vpop.permute.xlu0 %1249
        %1251 = vrot.lane.b32.xlu0 %v1229, 1
        %v1252 = vpop.permute.xlu0 %1251
        %1253 = vrot.lane.b32.xlu0 %v1230, 1
        %v1254 = vpop.permute.xlu0 %1253
        %1255 = vrot.lane.b32.xlu0 %v1231, 1
        %v1256 = vpop.permute.xlu0 %1255
        %1257 = vrot.lane.b32.xlu0 %v1232, 1
        %v1258 = vpop.permute.xlu0 %1257
        %1259 = vrot.lane.b32.xlu0 %v1233, 1
        %v1260 = vpop.permute.xlu0 %1259
        %1261 = vrot.lane.b32.xlu0 %v1234, 1
        %v1262 = vpop.permute.xlu0 %1261
        %1263 = vrot.lane.b32.xlu0 %v1235, 1
        %v1264 = vpop.permute.xlu0 %1263
        %1265 = vrot.lane.b32.xlu0 %v1236, 1
        %v1266 = vpop.permute.xlu0 %1265
        %1267 = vrot.lane.b32.xlu0 %v1237, 1
        %v1268 = vpop.permute.xlu0 %1267
        %1269 = vrot.lane.b32.xlu0 %v1238, 1
        %v1270 = vpop.permute.xlu0 %1269
        %v1271 = vsel %vm740, %v1240, 0.0
        %v1272 = vsel %vm740, %v1242, 0.0
        %v1273 = vsel %vm740, %v1244, 0.0
        %v1274 = vsel %vm740, %v1246, 0.0
        %v1275 = vsel %vm740, %v1248, 0.0
        %v1276 = vsel %vm740, %v1250, 0.0
        %v1277 = vsel %vm740, %v1252, 0.0
        %v1278 = vsel %vm740, %v1254, 0.0
        %v1279 = vsel %vm740, %v1256, 0.0
        %v1280 = vsel %vm740, %v1258, 0.0
        %v1281 = vsel %vm740, %v1260, 0.0
        %v1282 = vsel %vm740, %v1262, 0.0
        %v1283 = vsel %vm740, %v1264, 0.0
        %v1284 = vsel %vm740, %v1266, 0.0
        %v1285 = vsel %vm740, %v1268, 0.0
        %v1286 = vsel %vm740, %v1270, 0.0
        %s1287 = sadd.s32 %s429, 3
        %s1288 = sld [smem:[#allocation3 + %s1287]]
        %v1289 = vstv %s1288
        %v1290 = vmul.f32 %v1289, %v1271
        %v1291 = vmul.f32 %v1289, %v1272
        %v1292 = vmul.f32 %v1289, %v1273
        %v1293 = vmul.f32 %v1289, %v1274
        %v1294 = vmul.f32 %v1289, %v1275
        %v1295 = vmul.f32 %v1289, %v1276
        %v1296 = vmul.f32 %v1289, %v1277
        %v1297 = vmul.f32 %v1289, %v1278
        %v1298 = vmul.f32 %v1289, %v1279
        %v1299 = vmul.f32 %v1289, %v1280
        %v1300 = vmul.f32 %v1289, %v1281
        %v1301 = vmul.f32 %v1289, %v1282
        %v1302 = vmul.f32 %v1289, %v1283
        %v1303 = vmul.f32 %v1289, %v1284
        %v1304 = vmul.f32 %v1289, %v1285
        %v1305 = vmul.f32 %v1289, %v1286
        %v1306 = vadd.f32 %v1142, %v1290
        %v1307 = vadd.f32 %v1143, %v1291
        %v1308 = vadd.f32 %v1144, %v1292
        %v1309 = vadd.f32 %v1145, %v1293
        %v1310 = vadd.f32 %v1146, %v1294
        %v1311 = vadd.f32 %v1147, %v1295
        %v1312 = vadd.f32 %v1148, %v1296
        %v1313 = vadd.f32 %v1149, %v1297
        %v1314 = vadd.f32 %v1150, %v1298
        %v1315 = vadd.f32 %v1151, %v1299
        %v1316 = vadd.f32 %v1152, %v1300
        %v1317 = vadd.f32 %v1153, %v1301
        %v1318 = vadd.f32 %v1154, %v1302
        %v1319 = vadd.f32 %v1155, %v1303
        %v1320 = vadd.f32 %v1156, %v1304
        %v1321 = vadd.f32 %v1157, %v1305
        %s1322 = sadd.s32 %s429, 4
        %s1323 = sld [smem:[#allocation3 + %s1322]]
        %v1324 = vstv %s1323
        %v1325 = vmul.f32 %v1324, %v1223
        %v1326 = vmul.f32 %v1324, %v1224
        %v1327 = vmul.f32 %v1324, %v1225
        %v1328 = vmul.f32 %v1324, %v1226
        %v1329 = vmul.f32 %v1324, %v1227
        %v1330 = vmul.f32 %v1324, %v1228
        %v1331 = vmul.f32 %v1324, %v1229
        %v1332 = vmul.f32 %v1324, %v1230
        %v1333 = vmul.f32 %v1324, %v1231
        %v1334 = vmul.f32 %v1324, %v1232
        %v1335 = vmul.f32 %v1324, %v1233
        %v1336 = vmul.f32 %v1324, %v1234
        %v1337 = vmul.f32 %v1324, %v1235
        %v1338 = vmul.f32 %v1324, %v1236
        %v1339 = vmul.f32 %v1324, %v1237
        %v1340 = vmul.f32 %v1324, %v1238
        %v1341 = vadd.f32 %v1306, %v1325
        %v1342 = vadd.f32 %v1307, %v1326
        %v1343 = vadd.f32 %v1308, %v1327
        %v1344 = vadd.f32 %v1309, %v1328
        %v1345 = vadd.f32 %v1310, %v1329
        %v1346 = vadd.f32 %v1311, %v1330
        %v1347 = vadd.f32 %v1312, %v1331
        %v1348 = vadd.f32 %v1313, %v1332
        %v1349 = vadd.f32 %v1314, %v1333
        %v1350 = vadd.f32 %v1315, %v1334
        %v1351 = vadd.f32 %v1316, %v1335
        %v1352 = vadd.f32 %v1317, %v1336
        %v1353 = vadd.f32 %v1318, %v1337
        %v1354 = vadd.f32 %v1319, %v1338
        %v1355 = vadd.f32 %v1320, %v1339
        %v1356 = vadd.f32 %v1321, %v1340
        %1357 = vrot.lane.b32.xlu0 %v1223, 127
        %v1358 = vpop.permute.xlu0 %1357
        %1359 = vrot.lane.b32.xlu0 %v1224, 127
        %v1360 = vpop.permute.xlu0 %1359
        %1361 = vrot.lane.b32.xlu0 %v1225, 127
        %v1362 = vpop.permute.xlu0 %1361
        %1363 = vrot.lane.b32.xlu0 %v1226, 127
        %v1364 = vpop.permute.xlu0 %1363
        %1365 = vrot.lane.b32.xlu0 %v1227, 127
        %v1366 = vpop.permute.xlu0 %1365
        %1367 = vrot.lane.b32.xlu0 %v1228, 127
        %v1368 = vpop.permute.xlu0 %1367
        %1369 = vrot.lane.b32.xlu0 %v1229, 127
        %v1370 = vpop.permute.xlu0 %1369
        %1371 = vrot.lane.b32.xlu0 %v1230, 127
        %v1372 = vpop.permute.xlu0 %1371
        %1373 = vrot.lane.b32.xlu0 %v1231, 127
        %v1374 = vpop.permute.xlu0 %1373
        %1375 = vrot.lane.b32.xlu0 %v1232, 127
        %v1376 = vpop.permute.xlu0 %1375
        %1377 = vrot.lane.b32.xlu0 %v1233, 127
        %v1378 = vpop.permute.xlu0 %1377
        %1379 = vrot.lane.b32.xlu0 %v1234, 127
        %v1380 = vpop.permute.xlu0 %1379
        %1381 = vrot.lane.b32.xlu0 %v1235, 127
        %v1382 = vpop.permute.xlu0 %1381
        %1383 = vrot.lane.b32.xlu0 %v1236, 127
        %v1384 = vpop.permute.xlu0 %1383
        %1385 = vrot.lane.b32.xlu0 %v1237, 127
        %v1386 = vpop.permute.xlu0 %1385
        %1387 = vrot.lane.b32.xlu0 %v1238, 127
        %v1388 = vpop.permute.xlu0 %1387
        %v1389 = vsel %vm825, %v1358, 0.0
        %v1390 = vsel %vm825, %v1360, 0.0
        %v1391 = vsel %vm825, %v1362, 0.0
        %v1392 = vsel %vm825, %v1364, 0.0
        %v1393 = vsel %vm825, %v1366, 0.0
        %v1394 = vsel %vm825, %v1368, 0.0
        %v1395 = vsel %vm825, %v1370, 0.0
        %v1396 = vsel %vm825, %v1372, 0.0
        %v1397 = vsel %vm825, %v1374, 0.0
        %v1398 = vsel %vm825, %v1376, 0.0
        %v1399 = vsel %vm825, %v1378, 0.0
        %v1400 = vsel %vm825, %v1380, 0.0
        %v1401 = vsel %vm825, %v1382, 0.0
        %v1402 = vsel %vm825, %v1384, 0.0
        %v1403 = vsel %vm825, %v1386, 0.0
        %v1404 = vsel %vm825, %v1388, 0.0
        %s1405 = sadd.s32 %s429, 5
        %s1406 = sld [smem:[#allocation3 + %s1405]]
        %v1407 = vstv %s1406
        %v1408 = vmul.f32 %v1407, %v1389
        %v1409 = vmul.f32 %v1407, %v1390
        %v1410 = vmul.f32 %v1407, %v1391
        %v1411 = vmul.f32 %v1407, %v1392
        %v1412 = vmul.f32 %v1407, %v1393
        %v1413 = vmul.f32 %v1407, %v1394
        %v1414 = vmul.f32 %v1407, %v1395
        %v1415 = vmul.f32 %v1407, %v1396
        %v1416 = vmul.f32 %v1407, %v1397
        %v1417 = vmul.f32 %v1407, %v1398
        %v1418 = vmul.f32 %v1407, %v1399
        %v1419 = vmul.f32 %v1407, %v1400
        %v1420 = vmul.f32 %v1407, %v1401
        %v1421 = vmul.f32 %v1407, %v1402
        %v1422 = vmul.f32 %v1407, %v1403
        %v1423 = vmul.f32 %v1407, %v1404
        %v1424 = vadd.f32 %v1341, %v1408
        %v1425 = vadd.f32 %v1342, %v1409
        %v1426 = vadd.f32 %v1343, %v1410
        %v1427 = vadd.f32 %v1344, %v1411
        %v1428 = vadd.f32 %v1345, %v1412
        %v1429 = vadd.f32 %v1346, %v1413
        %v1430 = vadd.f32 %v1347, %v1414
        %v1431 = vadd.f32 %v1348, %v1415
        %v1432 = vadd.f32 %v1349, %v1416
        %v1433 = vadd.f32 %v1350, %v1417
        %v1434 = vadd.f32 %v1351, %v1418
        %v1435 = vadd.f32 %v1352, %v1419
        %v1436 = vadd.f32 %v1353, %v1420
        %v1437 = vadd.f32 %v1354, %v1421
        %v1438 = vadd.f32 %v1355, %v1422
        %v1439 = vadd.f32 %v1356, %v1423
        %v1440 = vsel %vm320, -inf, %v1424
        %v1441 = vsel %vm321, -inf, %v1425
        %v1442 = vsel %vm322, -inf, %v1426
        %v1443 = vsel %vm323, -inf, %v1427
        %v1444 = vsel %vm324, -inf, %v1428
        %v1445 = vsel %vm325, -inf, %v1429
        %v1446 = vsel %vm326, -inf, %v1430
        %v1447 = vsel %vm327, -inf, %v1431
        %v1448 = vsel %vm328, -inf, %v1432
        %v1449 = vsel %vm329, -inf, %v1433
        %v1450 = vsel %vm330, -inf, %v1434
        %v1451 = vsel %vm331, -inf, %v1435
        %v1452 = vsel %vm332, -inf, %v1436
        %v1453 = vsel %vm333, -inf, %v1437
        %v1454 = vsel %vm334, -inf, %v1438
        %v1455 = vsel %vm335, -inf, %v1439
        %1456 = vmax.xlane.f32.xlu0 %v1440
        %v1457 = vpop.xlane.xlu0 %1456
        %1458 = vmax.xlane.f32.xlu0 %v1441
        %v1459 = vpop.xlane.xlu0 %1458
        %1460 = vmax.xlane.f32.xlu0 %v1442
        %v1461 = vpop.xlane.xlu0 %1460
        %1462 = vmax.xlane.f32.xlu0 %v1443
        %v1463 = vpop.xlane.xlu0 %1462
        %1464 = vmax.xlane.f32.xlu0 %v1444
        %v1465 = vpop.xlane.xlu0 %1464
        %1466 = vmax.xlane.f32.xlu0 %v1445
        %v1467 = vpop.xlane.xlu0 %1466
        %1468 = vmax.xlane.f32.xlu0 %v1446
        %v1469 = vpop.xlane.xlu0 %1468
        %1470 = vmax.xlane.f32.xlu0 %v1447
        %v1471 = vpop.xlane.xlu0 %1470
        %1472 = vmax.xlane.f32.xlu0 %v1448
        %v1473 = vpop.xlane.xlu0 %1472
        %1474 = vmax.xlane.f32.xlu0 %v1449
        %v1475 = vpop.xlane.xlu0 %1474
        %1476 = vmax.xlane.f32.xlu0 %v1450
        %v1477 = vpop.xlane.xlu0 %1476
        %1478 = vmax.xlane.f32.xlu0 %v1451
        %v1479 = vpop.xlane.xlu0 %1478
        %1480 = vmax.xlane.f32.xlu0 %v1452
        %v1481 = vpop.xlane.xlu0 %1480
        %1482 = vmax.xlane.f32.xlu0 %v1453
        %v1483 = vpop.xlane.xlu0 %1482
        %1484 = vmax.xlane.f32.xlu0 %v1454
        %v1485 = vpop.xlane.xlu0 %1484
        %1486 = vmax.xlane.f32.xlu0 %v1455
        %v1487 = vpop.xlane.xlu0 %1486
        %v1488 = vsub.f32 %v1440, %v1457
        %v1489 = vsub.f32 %v1441, %v1459
        %v1490 = vsub.f32 %v1442, %v1461
        %v1491 = vsub.f32 %v1443, %v1463
        %v1492 = vsub.f32 %v1444, %v1465
        %v1493 = vsub.f32 %v1445, %v1467
        %v1494 = vsub.f32 %v1446, %v1469
        %v1495 = vsub.f32 %v1447, %v1471
        %v1496 = vsub.f32 %v1448, %v1473
        %v1497 = vsub.f32 %v1449, %v1475
        %v1498 = vsub.f32 %v1450, %v1477
        %v1499 = vsub.f32 %v1451, %v1479
        %v1500 = vsub.f32 %v1452, %v1481
        %v1501 = vsub.f32 %v1453, %v1483
        %v1502 = vsub.f32 %v1454, %v1485
        %v1503 = vsub.f32 %v1455, %v1487
        %v1504 = vmul.f32 %v1488, 1.442695
        %v1505 = vpow.pop %v1504
        %v1506 = vmul.f32 %v1489, 1.442695
        %v1507 = vpow.pop %v1506
        %v1508 = vmul.f32 %v1490, 1.442695
        %v1509 = vpow.pop %v1508
        %v1510 = vmul.f32 %v1491, 1.442695
        %v1511 = vpow.pop %v1510
        %v1512 = vmul.f32 %v1492, 1.442695
        %v1513 = vpow.pop %v1512
        %v1514 = vmul.f32 %v1493, 1.442695
        %v1515 = vpow.pop %v1514
        %v1516 = vmul.f32 %v1494, 1.442695
        %v1517 = vpow.pop %v1516
        %v1518 = vmul.f32 %v1495, 1.442695
        %v1519 = vpow.pop %v1518
        %v1520 = vmul.f32 %v1496, 1.442695
        %v1521 = vpow.pop %v1520
        %v1522 = vmul.f32 %v1497, 1.442695
        %v1523 = vpow.pop %v1522
        %v1524 = vmul.f32 %v1498, 1.442695
        %v1525 = vpow.pop %v1524
        %v1526 = vmul.f32 %v1499, 1.442695
        %v1527 = vpow.pop %v1526
        %v1528 = vmul.f32 %v1500, 1.442695
        %v1529 = vpow.pop %v1528
        %v1530 = vmul.f32 %v1501, 1.442695
        %v1531 = vpow.pop %v1530
        %v1532 = vmul.f32 %v1502, 1.442695
        %v1533 = vpow.pop %v1532
        %v1534 = vmul.f32 %v1503, 1.442695
        %v1535 = vpow.pop %v1534
        %1536 = vadd.xlane.f32.xlu0 %v1505
        %v1537 = vpop.xlane.xlu0 %1536
        %1538 = vadd.xlane.f32.xlu0 %v1507
        %v1539 = vpop.xlane.xlu0 %1538
        %1540 = vadd.xlane.f32.xlu0 %v1509
        %v1541 = vpop.xlane.xlu0 %1540
        %1542 = vadd.xlane.f32.xlu0 %v1511
        %v1543 = vpop.xlane.xlu0 %1542
        %1544 = vadd.xlane.f32.xlu0 %v1513
        %v1545 = vpop.xlane.xlu0 %1544
        %1546 = vadd.xlane.f32.xlu0 %v1515
        %v1547 = vpop.xlane.xlu0 %1546
        %1548 = vadd.xlane.f32.xlu0 %v1517
        %v1549 = vpop.xlane.xlu0 %1548
        %1550 = vadd.xlane.f32.xlu0 %v1519
        %v1551 = vpop.xlane.xlu0 %1550
        %1552 = vadd.xlane.f32.xlu0 %v1521
        %v1553 = vpop.xlane.xlu0 %1552
        %1554 = vadd.xlane.f32.xlu0 %v1523
        %v1555 = vpop.xlane.xlu0 %1554
        %1556 = vadd.xlane.f32.xlu0 %v1525
        %v1557 = vpop.xlane.xlu0 %1556
        %1558 = vadd.xlane.f32.xlu0 %v1527
        %v1559 = vpop.xlane.xlu0 %1558
        %1560 = vadd.xlane.f32.xlu0 %v1529
        %v1561 = vpop.xlane.xlu0 %1560
        %1562 = vadd.xlane.f32.xlu0 %v1531
        %v1563 = vpop.xlane.xlu0 %1562
        %1564 = vadd.xlane.f32.xlu0 %v1533
        %v1565 = vpop.xlane.xlu0 %1564
        %1566 = vadd.xlane.f32.xlu0 %v1535
        %v1567 = vpop.xlane.xlu0 %1566
        %1568 = vmatprep.subr.mxu0 0.0
        %1569 = vmatpush1.msra.mxu0 %v412
        %1570 = vmatprep.subr.mxu0 0.0
        %1571 = vmatpush1.msra.mxu0 %v413
        %1572 = vmatprep.subr.mxu0 0.0
        %1573 = vmatpush1.msra.mxu0 %v414
        %1574 = vmatprep.subr.mxu0 0.0
        %1575 = vmatpush1.msra.mxu0 %v415
        %1576 = vmatprep.subr.mxu0 0.0
        %1577 = vmatpush1.msra.mxu0 %v416
        %1578 = vmatprep.subr.mxu0 0.0
        %1579 = vmatpush1.msra.mxu0 %v417
        %1580 = vmatprep.subr.mxu0 0.0
        %1581 = vmatpush1.msra.mxu0 %v418
        %1582 = vmatprep.subr.mxu0 0.0
        %1583 = vmatpush1.msra.mxu0 %v419
        %1584 = vmatprep.subr.mxu0 0.0
        %1585 = vmatpush1.msra.mxu0 %v420
        %1586 = vmatprep.subr.mxu0 0.0
        %1587 = vmatpush1.msra.mxu0 %v421
        %1588 = vmatprep.subr.mxu0 0.0
        %1589 = vmatpush1.msra.mxu0 %v422
        %1590 = vmatprep.subr.mxu0 0.0
        %1591 = vmatpush1.msra.mxu0 %v423
        %1592 = vmatprep.subr.mxu0 0.0
        %1593 = vmatpush1.msra.mxu0 %v424
        %1594 = vmatprep.subr.mxu0 0.0
        %1595 = vmatpush1.msra.mxu0 %v425
        %1596 = vmatprep.subr.mxu0 0.0
        %1597 = vmatpush1.msra.mxu0 %v426
        %1598 = vmatprep.subr.mxu0 0.0
        %1599 = vmatpush1.msra.mxu0 %v427
        %1600 = vmatprep.subr.mxu0 0.0
        %1601 = vmatpush1.msra.mxu0 0.0
        %1602 = vmatprep.subr.mxu0 0.0
        %1603 = vmatpush1.msra.mxu0 0.0
        %1604 = vmatprep.subr.mxu0 0.0
        %1605 = vmatpush1.msra.mxu0 0.0
        %1606 = vmatprep.subr.mxu0 0.0
        %1607 = vmatpush1.msra.mxu0 0.0
        %1608 = vmatprep.subr.mxu0 0.0
        %1609 = vmatpush1.msra.mxu0 0.0
        %1610 = vmatprep.subr.mxu0 0.0
        %1611 = vmatpush1.msra.mxu0 0.0
        %1612 = vmatprep.subr.mxu0 0.0
        %1613 = vmatpush1.msra.mxu0 0.0
        %1614 = vmatprep.subr.mxu0 0.0
        %1615 = vmatpush1.msra.mxu0 0.0
        %1616 = vmatprep.subr.mxu0 0.0
        %1617 = vmatpush1.msra.mxu0 0.0
        %1618 = vmatprep.subr.mxu0 0.0
        %1619 = vmatpush1.msra.mxu0 0.0
        %1620 = vmatprep.subr.mxu0 0.0
        %1621 = vmatpush1.msra.mxu0 0.0
        %1622 = vmatprep.subr.mxu0 0.0
        %1623 = vmatpush1.msra.mxu0 0.0
        %1624 = vmatprep.subr.mxu0 0.0
        %1625 = vmatpush1.msra.mxu0 0.0
        %1626 = vmatprep.subr.mxu0 0.0
        %1627 = vmatpush1.msra.mxu0 0.0
        %1628 = vmatprep.subr.mxu0 0.0
        %1629 = vmatpush1.msra.mxu0 0.0
        %1630 = vmatprep.subr.mxu0 0.0
        %1631 = vmatpush1.msra.mxu0 0.0
        %1632 = vmatprep.mubr.f32.mxu0 0.0
        %1633 = vmatmul.mubr.f32.gmra.mrb[0].mxu0 %v1505
        %v1634 = vpop.f32.mrb[0].mxu0
        %v1635 = vadd.f32 0.0, %v1634
        %v1636 = vpop.f32.mrb[0].mxu0
        %1637 = vmatprep.mubr.f32.mxu0 0.0
        %1638 = vmatmul.mubr.f32.gmra.mrb[0].mxu0 %v1507
        %v1639 = vpop.f32.mrb[0].mxu0
        %v1640 = vadd.f32 0.0, %v1639
        %v1641 = vpop.f32.mrb[0].mxu0
        %1642 = vmatprep.mubr.f32.mxu0 0.0
        %1643 = vmatmul.mubr.f32.gmra.mrb[0].mxu0 %v1509
        %v1644 = vpop.f32.mrb[0].mxu0
        %v1645 = vadd.f32 0.0, %v1644
        %v1646 = vpop.f32.mrb[0].mxu0
        %1647 = vmatprep.mubr.f32.mxu0 0.0
        %1648 = vmatmul.mubr.f32.gmra.mrb[0].mxu0 %v1511
        %v1649 = vpop.f32.mrb[0].mxu0
        %v1650 = vadd.f32 0.0, %v1649
        %v1651 = vpop.f32.mrb[0].mxu0
        %1652 = vmatprep.mubr.f32.mxu0 0.0
        %1653 = vmatmul.mubr.f32.gmra.mrb[0].mxu0 %v1513
        %v1654 = vpop.f32.mrb[0].mxu0
        %v1655 = vadd.f32 0.0, %v1654
        %v1656 = vpop.f32.mrb[0].mxu0
        %1657 = vmatprep.mubr.f32.mxu0 0.0
        %1658 = vmatmul.mubr.f32.gmra.mrb[0].mxu0 %v1515
        %v1659 = vpop.f32.mrb[0].mxu0
        %v1660 = vadd.f32 0.0, %v1659
        %v1661 = vpop.f32.mrb[0].mxu0
        %1662 = vmatprep.mubr.f32.mxu0 0.0
        %1663 = vmatmul.mubr.f32.gmra.mrb[0].mxu0 %v1517
        %v1664 = vpop.f32.mrb[0].mxu0
        %v1665 = vadd.f32 0.0, %v1664
        %v1666 = vpop.f32.mrb[0].mxu0
        %1667 = vmatprep.mubr.f32.mxu0 0.0
        %1668 = vmatmul.mubr.f32.gmra.mrb[0].mxu0 %v1519
        %v1669 = vpop.f32.mrb[0].mxu0
        %v1670 = vadd.f32 0.0, %v1669
        %v1671 = vpop.f32.mrb[0].mxu0
        %1672 = vmatprep.mubr.f32.mxu0 0.0
        %1673 = vmatmul.mubr.f32.gmra.mrb[0].mxu0 %v1521
        %v1674 = vpop.f32.mrb[0].mxu0
        %v1675 = vadd.f32 0.0, %v1674
        %v1676 = vpop.f32.mrb[0].mxu0
        %1677 = vmatprep.mubr.f32.mxu0 0.0
        %1678 = vmatmul.mubr.f32.gmra.mrb[0].mxu0 %v1523
        %v1679 = vpop.f32.mrb[0].mxu0
        %v1680 = vadd.f32 0.0, %v1679
        %v1681 = vpop.f32.mrb[0].mxu0
        %1682 = vmatprep.mubr.f32.mxu0 0.0
        %1683 = vmatmul.mubr.f32.gmra.mrb[0].mxu0 %v1525
        %v1684 = vpop.f32.mrb[0].mxu0
        %v1685 = vadd.f32 0.0, %v1684
        %v1686 = vpop.f32.mrb[0].mxu0
        %1687 = vmatprep.mubr.f32.mxu0 0.0
        %1688 = vmatmul.mubr.f32.gmra.mrb[0].mxu0 %v1527
        %v1689 = vpop.f32.mrb[0].mxu0
        %v1690 = vadd.f32 0.0, %v1689
        %v1691 = vpop.f32.mrb[0].mxu0
        %1692 = vmatprep.mubr.f32.mxu0 0.0
        %1693 = vmatmul.mubr.f32.gmra.mrb[0].mxu0 %v1529
        %v1694 = vpop.f32.mrb[0].mxu0
        %v1695 = vadd.f32 0.0, %v1694
        %v1696 = vpop.f32.mrb[0].mxu0
        %1697 = vmatprep.mubr.f32.mxu0 0.0
        %1698 = vmatmul.mubr.f32.gmra.mrb[0].mxu0 %v1531
        %v1699 = vpop.f32.mrb[0].mxu0
        %v1700 = vadd.f32 0.0, %v1699
        %v1701 = vpop.f32.mrb[0].mxu0
        %1702 = vmatprep.mubr.f32.mxu0 0.0
        %1703 = vmatmul.mubr.f32.gmra.mrb[0].mxu0 %v1533
        %v1704 = vpop.f32.mrb[0].mxu0
        %v1705 = vadd.f32 0.0, %v1704
        %v1706 = vpop.f32.mrb[0].mxu0
        %1707 = vmatprep.mubr.f32.mxu0 0.0
        %1708 = vmatmul.mubr.f32.gmra.mrb[0].mxu0 %v1535
        %v1709 = vpop.f32.mrb[0].mxu0
        %v1710 = vadd.f32 0.0, %v1709
        %v1711 = vpop.f32.mrb[0].mxu0
        %1712 = vdwg.mxu0
        %v1713 = vrcp.pop %v1537
        %v1714 = vrcp.pop %v1539
        %v1715 = vrcp.pop %v1541
        %v1716 = vrcp.pop %v1543
        %v1717 = vrcp.pop %v1545
        %v1718 = vrcp.pop %v1547
        %v1719 = vrcp.pop %v1549
        %v1720 = vrcp.pop %v1551
        %v1721 = vrcp.pop %v1553
        %v1722 = vrcp.pop %v1555
        %v1723 = vrcp.pop %v1557
        %v1724 = vrcp.pop %v1559
        %v1725 = vrcp.pop %v1561
        %v1726 = vrcp.pop %v1563
        %v1727 = vrcp.pop %v1565
        %v1728 = vrcp.pop %v1567
        %v1729 = vmul.f32 %v1635, %v1713
        %v1730 = vmul.f32 %v1640, %v1714
        %v1731 = vmul.f32 %v1645, %v1715
        %v1732 = vmul.f32 %v1650, %v1716
        %v1733 = vmul.f32 %v1655, %v1717
        %v1734 = vmul.f32 %v1660, %v1718
        %v1735 = vmul.f32 %v1665, %v1719
        %v1736 = vmul.f32 %v1670, %v1720
        %v1737 = vmul.f32 %v1675, %v1721
        %v1738 = vmul.f32 %v1680, %v1722
        %v1739 = vmul.f32 %v1685, %v1723
        %v1740 = vmul.f32 %v1690, %v1724
        %v1741 = vmul.f32 %v1695, %v1725
        %v1742 = vmul.f32 %v1700, %v1726
        %v1743 = vmul.f32 %v1705, %v1727
        %v1744 = vmul.f32 %v1710, %v1728
        %s1745 = scalar_lea.vmem %s298, %s376
        %1746 = vst.msk [vmem:[%s1745] sm:$0xff] %vm430, %v1729
        %1747 = vst.msk [vmem:[%s1745 + $0x8] sm:$0xff] %vm430, %v1730
        %1748 = vst.msk [vmem:[%s1745 + $0x10] sm:$0xff] %vm430, %v1731
        %1749 = vst.msk [vmem:[%s1745 + $0x18] sm:$0xff] %vm430, %v1732
        %1750 = vst.msk [vmem:[%s1745 + $0x20] sm:$0xff] %vm430, %v1733
        %1751 = vst.msk [vmem:[%s1745 + $0x28] sm:$0xff] %vm430, %v1734
        %1752 = vst.msk [vmem:[%s1745 + $0x30] sm:$0xff] %vm430, %v1735
        %1753 = vst.msk [vmem:[%s1745 + $0x38] sm:$0xff] %vm430, %v1736
        %1754 = vst.msk [vmem:[%s1745 + $0x40] sm:$0xff] %vm430, %v1737
        %1755 = vst.msk [vmem:[%s1745 + $0x48] sm:$0xff] %vm430, %v1738
        %1756 = vst.msk [vmem:[%s1745 + $0x50] sm:$0xff] %vm430, %v1739
        %1757 = vst.msk [vmem:[%s1745 + $0x58] sm:$0xff] %vm430, %v1740
        %1758 = vst.msk [vmem:[%s1745 + $0x60] sm:$0xff] %vm430, %v1741
        %1759 = vst.msk [vmem:[%s1745 + $0x68] sm:$0xff] %vm430, %v1742
        %1760 = vst.msk [vmem:[%s1745 + $0x70] sm:$0xff] %vm430, %v1743
        %1761 = vst.msk [vmem:[%s1745 + $0x78] sm:$0xff] %vm430, %v1744
      $region37: #{tpu_custom_call.1} parent=31 // loop_footer
        %s375 = sadd.s32 1, %s371
      $region38: #{tpu_custom_call.1} parent=31 // loop_footer_branch
        %370 = sbr.rel target = $region34
      $region39: #{tpu_custom_call.1} parent=31 // loop_exit
        _
      %s1762 = smul.u32 2, %s26
      %p1763 = scmp.lt.s32.totalorder %s25, 1
      %s1764 = scalar_select %p1763, %s25, 1
      %p1765 = scmp.lt.s32.totalorder %s1762, 3
      %s1766 = scalar_select %p1765, %s1762, 3
      %s1767 = smul.addr %s1766, 16
      %s1768 = smul.addr %s1764, 64
      %s1769 = sadd.s32 %s1767, %s1768
      %s1770 = smul.addr %s1769, 8
      %s1771 = scalar_lea.vmem %s4, %s1770
      // Predicated region
      $region40: #{tpu_custom_call.1} parent=31 // pred_check
        %p1772 = pneg %p137
      $region41: #{tpu_custom_call.1} parent=31 // pred_check_branch
        %1774 = sbr.rel (%p1772) target = $region43
      $region42: #{tpu_custom_call.1} parent=31 // pred_region
        %s1775 = smul.u32 2, %s26
      $region43: #{tpu_custom_call.1} parent=31 // pred_fallthru
        _
    $region32: #{tpu_custom_call.1} parent=5 // pred_fallthru
      _
    %p1776 = scmp.le.s32.totalorder 2, %s16
    // Predicated region
    $region44: #{tpu_custom_call.1} parent=5 // pred_check
      %p1777 = pneg %p1776
    $region45: #{tpu_custom_call.1} parent=5 // pred_check_branch
      %1779 = sbr.rel (%p1777) target = $region47
    $region46: #{tpu_custom_call.1} parent=5 // pred_region
      %s1780 = ssub.s32 %s16, 2
      // Predicated region
      $region48: #{tpu_custom_call.1} parent=46 // pred_check
        %p1781 = pneg %p143
      $region49: #{tpu_custom_call.1} parent=46 // pred_check_branch
        %1783 = sbr.rel (%p1781) target = $region51
      $region50: #{tpu_custom_call.1} parent=46 // pred_region
        %s1784 = smul.u32 2, %s28
        %p1785 = scmp.lt.s32.totalorder %s27, 1
        %s1786 = scalar_select %p1785, %s27, 1
        %p1787 = scmp.lt.s32.totalorder %s1784, 3
        %s1788 = scalar_select %p1787, %s1784, 3
        %s1789 = smul.addr %s1788, 16
        %s1790 = smul.addr %s1786, 64
        %s1791 = sadd.s32 %s1789, %s1790
        %s1792 = smul.addr %s1791, 8
        %s1793 = scalar_lea.vmem %s4, %s1792
      $region51: #{tpu_custom_call.1} parent=46 // pred_fallthru
        _
    $region47: #{tpu_custom_call.1} parent=5 // pred_fallthru
      _
  $region6: #{tpu_custom_call.1} parent=0 // loop_footer
    %s20 = sadd.s32 1, %s16
  $region7: #{tpu_custom_call.1} parent=0 // loop_footer_branch
    %15 = sbr.rel target = $region3
  $region8: #{tpu_custom_call.1} parent=0 // loop_exit
    _

</llo_original>
